<compile_context>
chip_gen: v6e
topology: v6e:2x2x1
jax: 0.10.0
libtpu: 0.0.40
codegen_flags: <defaults>
</compile_context>

<pallas_src>
import functools

import numpy as np
import jax
import jax.numpy as jnp
from jax import lax
from jax.experimental import pallas as pl
from jax.experimental.pallas import tpu as pltpu


# --------------------------------------------------------------------------
# Fused attention kernel (one grid step == one batch element x one query tile)
# --------------------------------------------------------------------------

def _esa_kernel(xq_ref, pkv_ref, wq_ref, wk_ref, wv_ref, wo_ref,
                o_ref, out_all_ref, *, heads, dh):
    """Fused EfficientSelfAttention for one (batch, query-tile) step.

    xq_ref      : (C, TQ)       channel-major input tile (queries on lanes)
    pkv_ref     : (C*r*r, HWr)  channel-major space-to-depth patches (k/v source)
    wq_ref      : (C, C)        q projection weights, 1/sqrt(dh) pre-folded
    wk_ref      : (C, C*r*r)    k projection weights
    wv_ref      : (C, C*r*r)    v projection weights
    wo_ref      : (C, C)        output projection weights
    o_ref       : (C, TQ)       lane-dense output tile
    out_all_ref : (C, TQ)       VMEM scratch holding head-concatenated PV output
    """
    xT = xq_ref[...]           # (C, TQ)
    pT = pkv_ref[...]          # (C*r*r, HWr)

    # Head-batched projections: three full-C MXU matmuls (M=C=32) instead of
    # 3*heads matmuls with M or N = dh = 8.
    qT_all = jnp.dot(wq_ref[...], xT, preferred_element_type=jnp.float32)   # (C, TQ)
    kT_all = jnp.dot(wk_ref[...], pT, preferred_element_type=jnp.float32)   # (C, HWr)
    vT_all = jnp.dot(wv_ref[...], pT, preferred_element_type=jnp.float32)   # (C, HWr)

    # contract the dh axis (axis 0 of both operands) -> (HWr, TQ)
    trans_lhs_dims = (((0,), (0,)), ((), ()))

    for h in range(heads):                 # heads is small; static unroll
        lo = h * dh
        qT = qT_all[lo:lo + dh, :]         # (dh, TQ)   8-row sublane slice
        kT = kT_all[lo:lo + dh, :]         # (dh, HWr)
        vT = vT_all[lo:lo + dh, :]         # (dh, HWr)

        # simT[j, i] = sum_d kT[d, j] * qT[d, i]  (keys on sublanes, queries on lanes)
        simT = lax.dot_general(kT, qT, trans_lhs_dims,
                               preferred_element_type=jnp.float32)           # (HWr, TQ)

        # softmax over keys (axis 0); normalization deferred past the PV matmul
        m = jnp.max(simT, axis=0, keepdims=True)                             # (1, TQ)
        p = jnp.exp(simT - m)                                                # (HWr, TQ)
        s = jnp.sum(p, axis=0, keepdims=True)                                # (1, TQ)

        outT = jnp.dot(vT, p, preferred_element_type=jnp.float32)            # (dh, TQ)

        # normalize only dh rows (8xTQ multiply + EUP reciprocal) instead of a
        # (HWr, TQ) divide, and write straight into this head's 8-row slot.
        out_all_ref[lo:lo + dh, :] = outT * pl.reciprocal(s)

    # Head concat + to_out folded into ONE (C, C) @ (C, TQ) matmul.
    o_ref[...] = jnp.dot(wo_ref[...], out_all_ref[...],
                         preferred_element_type=jnp.float32).astype(o_ref.dtype)


# --------------------------------------------------------------------------
# Wrapper: layout glue (reshapes / space-to-depth) + single pallas_call
# --------------------------------------------------------------------------

def efficient_self_attention(params, x, *, heads, reduction_ratio):
    """x: (B, C, H, W) float32 -> (B, C, H, W) float32."""
    B, C, H, W = x.shape
    r = reduction_ratio
    dh = C // heads
    Hr, Wr = H // r, W // r
    HW, HWr = H * W, Hr * Wr
    Crr = C * r * r
    scale = float(dh) ** (-0.5)

    # Query tile: lane-dense (multiple of 128) whenever possible; also gives
    # the grid a second parallel axis so both v7x TensorCores stay busy when
    # B == 1, and is the scaling path for large HW (simT never exceeds
    # (HWr, TQ) in VMEM).
    TQ = 128 if (HW % 128 == 0 and HW > 128) else HW
    nq = HW // TQ

    # Weights, pre-arranged for full-C standard-orientation matmuls.
    wq = params["to_q"][:, :, 0, 0] * scale          # fold 1/sqrt(dh) into Wq
    wk = params["to_kv"][:C].reshape(C, Crr)         # (o, c, i, j) -> (o, c*r*r+i*r+j)
    wv = params["to_kv"][C:].reshape(C, Crr)
    wo = params["to_out"][:, :, 0, 0]

    # Channel-major activations (layout glue only; spatial flattening is
    # row-major over (H, W), matching the module's '(x y)' rearrange).
    xq = x.reshape(B, C, HW)                                             # (B, C, HW)
    patches = x.reshape(B, C, Hr, r, Wr, r)                              # [b,c,I,i,J,j]
    pkv = patches.transpose(0, 1, 3, 5, 2, 4).reshape(B, Crr, HWr)       # (B, C*r*r, HWr)

    flops = 2 * B * (C * C * HW                      # q projection
                     + nq * 2 * C * Crr * HWr        # k/v projections (per q tile)
                     + 2 * C * HWr * HW              # sim + PV across heads
                     + C * C * HW)                   # output projection
    cost = pl.CostEstimate(
        flops=flops,
        transcendentals=B * heads * HWr * HW,        # exp
        bytes_accessed=4 * (2 * B * C * HW + B * nq * Crr * HWr
                            + 2 * C * C + 2 * C * Crr))

    out = pl.pallas_call(
        functools.partial(_esa_kernel, heads=heads, dh=dh),
        out_shape=jax.ShapeDtypeStruct((B, C, HW), jnp.float32),
        grid_spec=pltpu.PrefetchScalarGridSpec(
            num_scalar_prefetch=0,
            grid=(B, nq),
            in_specs=[
                pl.BlockSpec((None, C, TQ), lambda b, q: (b, 0, q)),
                pl.BlockSpec((None, Crr, HWr), lambda b, q: (b, 0, 0)),
                pl.BlockSpec((C, C), lambda b, q: (0, 0)),
                pl.BlockSpec((C, Crr), lambda b, q: (0, 0)),
                pl.BlockSpec((C, Crr), lambda b, q: (0, 0)),
                pl.BlockSpec((C, C), lambda b, q: (0, 0)),
            ],
            out_specs=pl.BlockSpec((None, C, TQ), lambda b, q: (b, 0, q)),
            scratch_shapes=[pltpu.VMEM((C, TQ), jnp.float32)],
        ),
        compiler_params=pltpu.CompilerParams(
            dimension_semantics=("parallel", "parallel")),
        cost_estimate=cost,
    )(xq, pkv, wq, wk, wv, wo)

    return out.reshape(B, C, H, W)


# --------------------------------------------------------------------------
# Deterministic parameter construction (PyTorch Conv2d default init, no bias)
# --------------------------------------------------------------------------

def init_params(key, dim, heads, reduction_ratio):
    k1, k2, k3 = jax.random.split(key, 3)

    def conv_w(k, cout, cin, ksize):
        bound = 1.0 / np.sqrt(cin * ksize * ksize)
        return jax.random.uniform(k, (cout, cin, ksize, ksize), jnp.float32,
                                  -bound, bound)

    return {
        "to_q": conv_w(k1, dim, dim, 1),
        "to_kv": conv_w(k2, dim * 2, dim, reduction_ratio),
        "to_out": conv_w(k3, dim, dim, 1),
    }


# --------------------------------------------------------------------------
# Pure-JAX reference (mirrors the PyTorch module exactly)
# --------------------------------------------------------------------------

def esa_reference(params, x, *, heads, reduction_ratio):
    B, C, H, W = x.shape
    r = reduction_ratio
    dh = C // heads
    scale = float(dh) ** (-0.5)

    wq = params["to_q"][:, :, 0, 0]
    wkv = params["to_kv"]
    wo = params["to_out"][:, :, 0, 0]

    q = jnp.einsum("oc,bchw->bohw", wq, x)
    kv = jax.lax.conv_general_dilated(
        x, jnp.transpose(wkv, (2, 3, 1, 0)),
        window_strides=(r, r), padding="VALID",
        dimension_numbers=("NCHW", "HWIO", "NCHW"))
    k, v = kv[:, :C], kv[:, C:]

    def to_bh(t):
        Bt, Ct, Ht, Wt = t.shape
        return (t.reshape(Bt, heads, dh, Ht * Wt)
                 .transpose(0, 1, 3, 2)
                 .reshape(Bt * heads, Ht * Wt, dh))

    qh, kh, vh = map(to_bh, (q, k, v))
    sim = jnp.einsum("bid,bjd->bij", qh, kh) * scale
    attn = jax.nn.softmax(sim, axis=-1)
    out = jnp.einsum("bij,bjd->bid", attn, vh)
    out = (out.reshape(B, heads, H * W, dh)
              .transpose(0, 1, 3, 2)
              .reshape(B, C, H, W))
    return jnp.einsum("oc,bchw->bohw", wo, out)


# --------------------------------------------------------------------------
# Main
# --------------------------------------------------------------------------

if __name__ == "__main__":
    key = jax.random.PRNGKey(0)
    kp, kx = jax.random.split(key)

    dim, heads, reduction_ratio = 32, 4, 2
    B, H, W = 2, 16, 16

    params = init_params(kp, dim, heads, reduction_ratio)
    x = jax.random.normal(kx, (B, dim, H, W), jnp.float32)

    fwd = jax.jit(functools.partial(efficient_self_attention,
                                    heads=heads,
                                    reduction_ratio=reduction_ratio))
    out = jax.block_until_ready(fwd(params, x))
    assert out.shape == (B, dim, H, W)

    ref = esa_reference(params, x, heads=heads, reduction_ratio=reduction_ratio)
    np.testing.assert_allclose(np.asarray(out), np.asarray(ref),
                               rtol=1e-4, atol=1e-4)

    print("KERNEL_OK")
</pallas_src>

<mosaic_0001>
module attributes {stable_mosaic.version = 11 : i64} {
  func.func @_esa_kernel(%arg0: i32, %arg1: i32, %arg2: memref<1x32x128xf32, #tpu.memory_space<vmem>>, %arg3: memref<1x128x64xf32, #tpu.memory_space<vmem>>, %arg4: memref<32x32xf32, #tpu.memory_space<vmem>>, %arg5: memref<32x128xf32, #tpu.memory_space<vmem>>, %arg6: memref<32x128xf32, #tpu.memory_space<vmem>>, %arg7: memref<32x32xf32, #tpu.memory_space<vmem>>, %arg8: memref<1x32x128xf32, #tpu.memory_space<vmem>>, %arg9: memref<32x128xf32, #tpu.memory_space<vmem>>) attributes {dimension_semantics = [#tpu.dimension_semantics<parallel>, #tpu.dimension_semantics<parallel>], iteration_bounds = array<i64: 2, 2>, scalar_prefetch = 0 : i64, scratch_operands = 1 : i64, tpu.core_type = #tpu.core_type<tc>, window_params = [{transform_indices = @transform_0, window_bounds = array<i64: 1, 32, 128>}, {transform_indices = @transform_1, window_bounds = array<i64: 1, 128, 64>}, {pipeline_mode = #tpu.pipeline_mode<synchronous>, transform_indices = @transform_2, window_bounds = array<i64: 32, 32>}, {pipeline_mode = #tpu.pipeline_mode<synchronous>, transform_indices = @transform_3, window_bounds = array<i64: 32, 128>}, {pipeline_mode = #tpu.pipeline_mode<synchronous>, transform_indices = @transform_4, window_bounds = array<i64: 32, 128>}, {pipeline_mode = #tpu.pipeline_mode<synchronous>, transform_indices = @transform_5, window_bounds = array<i64: 32, 32>}, {transform_indices = @transform_6, window_bounds = array<i64: 1, 32, 128>}]} {
    %c0 = arith.constant 0 : index
    %c0_0 = arith.constant 0 : index
    %c0_1 = arith.constant 0 : index
    %0 = vector.load %arg2[%c0, %c0_0, %c0_1] : memref<1x32x128xf32, #tpu.memory_space<vmem>>, vector<1x32x128xf32>
    %1 = vector.shape_cast %0 : vector<1x32x128xf32> to vector<32x128xf32>
    %c0_2 = arith.constant 0 : index
    %c0_3 = arith.constant 0 : index
    %c0_4 = arith.constant 0 : index
    %2 = vector.load %arg3[%c0_2, %c0_3, %c0_4] : memref<1x128x64xf32, #tpu.memory_space<vmem>>, vector<1x128x64xf32>
    %3 = vector.shape_cast %2 : vector<1x128x64xf32> to vector<128x64xf32>
    %c0_5 = arith.constant 0 : index
    %c0_6 = arith.constant 0 : index
    %4 = vector.load %arg4[%c0_5, %c0_6] : memref<32x32xf32, #tpu.memory_space<vmem>>, vector<32x32xf32>
    %cst = arith.constant dense<0.000000e+00> : vector<32x128xf32>
    %5 = tpu.matmul %4, %1, %cst {dimension_numbers = #tpu.dot_dimension_numbers<[1], [0], [0], [1], [0, 0, 1, 1], [], []>} : vector<32x32xf32>, vector<32x128xf32>, vector<32x128xf32> -> vector<32x128xf32>
    %c0_7 = arith.constant 0 : index
    %c0_8 = arith.constant 0 : index
    %6 = vector.load %arg5[%c0_7, %c0_8] : memref<32x128xf32, #tpu.memory_space<vmem>>, vector<32x128xf32>
    %cst_9 = arith.constant dense<0.000000e+00> : vector<32x64xf32>
    %7 = tpu.matmul %6, %3, %cst_9 {dimension_numbers = #tpu.dot_dimension_numbers<[1], [0], [0], [1], [0, 0, 1, 1], [], []>} : vector<32x128xf32>, vector<128x64xf32>, vector<32x64xf32> -> vector<32x64xf32>
    %c0_10 = arith.constant 0 : index
    %c0_11 = arith.constant 0 : index
    %8 = vector.load %arg6[%c0_10, %c0_11] : memref<32x128xf32, #tpu.memory_space<vmem>>, vector<32x128xf32>
    %cst_12 = arith.constant dense<0.000000e+00> : vector<32x64xf32>
    %9 = tpu.matmul %8, %3, %cst_12 {dimension_numbers = #tpu.dot_dimension_numbers<[1], [0], [0], [1], [0, 0, 1, 1], [], []>} : vector<32x128xf32>, vector<128x64xf32>, vector<32x64xf32> -> vector<32x64xf32>
    %10 = vector.extract_strided_slice %5 {offsets = [0, 0], sizes = [8, 128], strides = [1, 1]} : vector<32x128xf32> to vector<8x128xf32>
    %11 = vector.extract_strided_slice %7 {offsets = [0, 0], sizes = [8, 64], strides = [1, 1]} : vector<32x64xf32> to vector<8x64xf32>
    %12 = vector.extract_strided_slice %9 {offsets = [0, 0], sizes = [8, 64], strides = [1, 1]} : vector<32x64xf32> to vector<8x64xf32>
    %cst_13 = arith.constant dense<0.000000e+00> : vector<64x128xf32>
    %13 = tpu.matmul %11, %10, %cst_13 {dimension_numbers = #tpu.dot_dimension_numbers<[0], [0], [1], [1], [0, 1, 1, 1], [], []>} : vector<8x64xf32>, vector<8x128xf32>, vector<64x128xf32> -> vector<64x128xf32>
    %cst_14 = arith.constant dense<0xFF800000> : vector<128xf32>
    %14 = vector.multi_reduction <maximumf>, %13, %cst_14 [0] : vector<64x128xf32> to vector<128xf32>
    %15 = vector.shape_cast %14 : vector<128xf32> to vector<1x128xf32>
    %16 = vector.broadcast %15 : vector<1x128xf32> to vector<64x128xf32>
    %17 = arith.subf %13, %16 : vector<64x128xf32>
    %18 = math.exp %17 : vector<64x128xf32>
    %cst_15 = arith.constant dense<0.000000e+00> : vector<128xf32>
    %19 = vector.multi_reduction <add>, %18, %cst_15 [0] : vector<64x128xf32> to vector<128xf32>
    %20 = vector.shape_cast %19 : vector<128xf32> to vector<1x128xf32>
    %cst_16 = arith.constant dense<0.000000e+00> : vector<8x128xf32>
    %21 = tpu.matmul %12, %18, %cst_16 {dimension_numbers = #tpu.dot_dimension_numbers<[1], [0], [0], [1], [0, 0, 1, 1], [], []>} : vector<8x64xf32>, vector<64x128xf32>, vector<8x128xf32> -> vector<8x128xf32>
    %22 = tpu.reciprocal %20 : vector<1x128xf32> -> vector<1x128xf32>
    %23 = vector.broadcast %22 : vector<1x128xf32> to vector<8x128xf32>
    %24 = arith.mulf %21, %23 : vector<8x128xf32>
    %c0_17 = arith.constant 0 : index
    %c0_18 = arith.constant 0 : index
    %25 = vector.load %arg9[%c0_17, %c0_18] : memref<32x128xf32, #tpu.memory_space<vmem>>, vector<8x128xf32>
    tpu.vector_store %arg9[%c0_17, %c0_18], %24 {strides = array<i32>} : memref<32x128xf32, #tpu.memory_space<vmem>>, vector<8x128xf32>,
    %26 = vector.extract_strided_slice %5 {offsets = [8, 0], sizes = [8, 128], strides = [1, 1]} : vector<32x128xf32> to vector<8x128xf32>
    %27 = vector.extract_strided_slice %7 {offsets = [8, 0], sizes = [8, 64], strides = [1, 1]} : vector<32x64xf32> to vector<8x64xf32>
    %28 = vector.extract_strided_slice %9 {offsets = [8, 0], sizes = [8, 64], strides = [1, 1]} : vector<32x64xf32> to vector<8x64xf32>
    %cst_19 = arith.constant dense<0.000000e+00> : vector<64x128xf32>
    %29 = tpu.matmul %27, %26, %cst_19 {dimension_numbers = #tpu.dot_dimension_numbers<[0], [0], [1], [1], [0, 1, 1, 1], [], []>} : vector<8x64xf32>, vector<8x128xf32>, vector<64x128xf32> -> vector<64x128xf32>
    %cst_20 = arith.constant dense<0xFF800000> : vector<128xf32>
    %30 = vector.multi_reduction <maximumf>, %29, %cst_20 [0] : vector<64x128xf32> to vector<128xf32>
    %31 = vector.shape_cast %30 : vector<128xf32> to vector<1x128xf32>
    %32 = vector.broadcast %31 : vector<1x128xf32> to vector<64x128xf32>
    %33 = arith.subf %29, %32 : vector<64x128xf32>
    %34 = math.exp %33 : vector<64x128xf32>
    %cst_21 = arith.constant dense<0.000000e+00> : vector<128xf32>
    %35 = vector.multi_reduction <add>, %34, %cst_21 [0] : vector<64x128xf32> to vector<128xf32>
    %36 = vector.shape_cast %35 : vector<128xf32> to vector<1x128xf32>
    %cst_22 = arith.constant dense<0.000000e+00> : vector<8x128xf32>
    %37 = tpu.matmul %28, %34, %cst_22 {dimension_numbers = #tpu.dot_dimension_numbers<[1], [0], [0], [1], [0, 0, 1, 1], [], []>} : vector<8x64xf32>, vector<64x128xf32>, vector<8x128xf32> -> vector<8x128xf32>
    %38 = tpu.reciprocal %36 : vector<1x128xf32> -> vector<1x128xf32>
    %39 = vector.broadcast %38 : vector<1x128xf32> to vector<8x128xf32>
    %40 = arith.mulf %37, %39 : vector<8x128xf32>
    %c8 = arith.constant 8 : index
    %c0_23 = arith.constant 0 : index
    %41 = vector.load %arg9[%c8, %c0_23] : memref<32x128xf32, #tpu.memory_space<vmem>>, vector<8x128xf32>
    tpu.vector_store %arg9[%c8, %c0_23], %40 {strides = array<i32>} : memref<32x128xf32, #tpu.memory_space<vmem>>, vector<8x128xf32>,
    %42 = vector.extract_strided_slice %5 {offsets = [16, 0], sizes = [8, 128], strides = [1, 1]} : vector<32x128xf32> to vector<8x128xf32>
    %43 = vector.extract_strided_slice %7 {offsets = [16, 0], sizes = [8, 64], strides = [1, 1]} : vector<32x64xf32> to vector<8x64xf32>
    %44 = vector.extract_strided_slice %9 {offsets = [16, 0], sizes = [8, 64], strides = [1, 1]} : vector<32x64xf32> to vector<8x64xf32>
    %cst_24 = arith.constant dense<0.000000e+00> : vector<64x128xf32>
    %45 = tpu.matmul %43, %42, %cst_24 {dimension_numbers = #tpu.dot_dimension_numbers<[0], [0], [1], [1], [0, 1, 1, 1], [], []>} : vector<8x64xf32>, vector<8x128xf32>, vector<64x128xf32> -> vector<64x128xf32>
    %cst_25 = arith.constant dense<0xFF800000> : vector<128xf32>
    %46 = vector.multi_reduction <maximumf>, %45, %cst_25 [0] : vector<64x128xf32> to vector<128xf32>
    %47 = vector.shape_cast %46 : vector<128xf32> to vector<1x128xf32>
    %48 = vector.broadcast %47 : vector<1x128xf32> to vector<64x128xf32>
    %49 = arith.subf %45, %48 : vector<64x128xf32>
    %50 = math.exp %49 : vector<64x128xf32>
    %cst_26 = arith.constant dense<0.000000e+00> : vector<128xf32>
    %51 = vector.multi_reduction <add>, %50, %cst_26 [0] : vector<64x128xf32> to vector<128xf32>
    %52 = vector.shape_cast %51 : vector<128xf32> to vector<1x128xf32>
    %cst_27 = arith.constant dense<0.000000e+00> : vector<8x128xf32>
    %53 = tpu.matmul %44, %50, %cst_27 {dimension_numbers = #tpu.dot_dimension_numbers<[1], [0], [0], [1], [0, 0, 1, 1], [], []>} : vector<8x64xf32>, vector<64x128xf32>, vector<8x128xf32> -> vector<8x128xf32>
    %54 = tpu.reciprocal %52 : vector<1x128xf32> -> vector<1x128xf32>
    %55 = vector.broadcast %54 : vector<1x128xf32> to vector<8x128xf32>
    %56 = arith.mulf %53, %55 : vector<8x128xf32>
    %c16 = arith.constant 16 : index
    %c0_28 = arith.constant 0 : index
    %57 = vector.load %arg9[%c16, %c0_28] : memref<32x128xf32, #tpu.memory_space<vmem>>, vector<8x128xf32>
    tpu.vector_store %arg9[%c16, %c0_28], %56 {strides = array<i32>} : memref<32x128xf32, #tpu.memory_space<vmem>>, vector<8x128xf32>,
    %58 = vector.extract_strided_slice %5 {offsets = [24, 0], sizes = [8, 128], strides = [1, 1]} : vector<32x128xf32> to vector<8x128xf32>
    %59 = vector.extract_strided_slice %7 {offsets = [24, 0], sizes = [8, 64], strides = [1, 1]} : vector<32x64xf32> to vector<8x64xf32>
    %60 = vector.extract_strided_slice %9 {offsets = [24, 0], sizes = [8, 64], strides = [1, 1]} : vector<32x64xf32> to vector<8x64xf32>
    %cst_29 = arith.constant dense<0.000000e+00> : vector<64x128xf32>
    %61 = tpu.matmul %59, %58, %cst_29 {dimension_numbers = #tpu.dot_dimension_numbers<[0], [0], [1], [1], [0, 1, 1, 1], [], []>} : vector<8x64xf32>, vector<8x128xf32>, vector<64x128xf32> -> vector<64x128xf32>
    %cst_30 = arith.constant dense<0xFF800000> : vector<128xf32>
    %62 = vector.multi_reduction <maximumf>, %61, %cst_30 [0] : vector<64x128xf32> to vector<128xf32>
    %63 = vector.shape_cast %62 : vector<128xf32> to vector<1x128xf32>
    %64 = vector.broadcast %63 : vector<1x128xf32> to vector<64x128xf32>
    %65 = arith.subf %61, %64 : vector<64x128xf32>
    %66 = math.exp %65 : vector<64x128xf32>
    %cst_31 = arith.constant dense<0.000000e+00> : vector<128xf32>
    %67 = vector.multi_reduction <add>, %66, %cst_31 [0] : vector<64x128xf32> to vector<128xf32>
    %68 = vector.shape_cast %67 : vector<128xf32> to vector<1x128xf32>
    %cst_32 = arith.constant dense<0.000000e+00> : vector<8x128xf32>
    %69 = tpu.matmul %60, %66, %cst_32 {dimension_numbers = #tpu.dot_dimension_numbers<[1], [0], [0], [1], [0, 0, 1, 1], [], []>} : vector<8x64xf32>, vector<64x128xf32>, vector<8x128xf32> -> vector<8x128xf32>
    %70 = tpu.reciprocal %68 : vector<1x128xf32> -> vector<1x128xf32>
    %71 = vector.broadcast %70 : vector<1x128xf32> to vector<8x128xf32>
    %72 = arith.mulf %69, %71 : vector<8x128xf32>
    %c24 = arith.constant 24 : index
    %c0_33 = arith.constant 0 : index
    %73 = vector.load %arg9[%c24, %c0_33] : memref<32x128xf32, #tpu.memory_space<vmem>>, vector<8x128xf32>
    tpu.vector_store %arg9[%c24, %c0_33], %72 {strides = array<i32>} : memref<32x128xf32, #tpu.memory_space<vmem>>, vector<8x128xf32>,
    %c0_34 = arith.constant 0 : index
    %c0_35 = arith.constant 0 : index
    %74 = vector.load %arg7[%c0_34, %c0_35] : memref<32x32xf32, #tpu.memory_space<vmem>>, vector<32x32xf32>
    %c0_36 = arith.constant 0 : index
    %c0_37 = arith.constant 0 : index
    %75 = vector.load %arg9[%c0_36, %c0_37] : memref<32x128xf32, #tpu.memory_space<vmem>>, vector<32x128xf32>
    %cst_38 = arith.constant dense<0.000000e+00> : vector<32x128xf32>
    %76 = tpu.matmul %74, %75, %cst_38 {dimension_numbers = #tpu.dot_dimension_numbers<[1], [0], [0], [1], [0, 0, 1, 1], [], []>} : vector<32x32xf32>, vector<32x128xf32>, vector<32x128xf32> -> vector<32x128xf32>
    %c0_39 = arith.constant 0 : index
    %c0_40 = arith.constant 0 : index
    %c0_41 = arith.constant 0 : index
    %77 = vector.load %arg8[%c0_39, %c0_40, %c0_41] : memref<1x32x128xf32, #tpu.memory_space<vmem>>, vector<1x32x128xf32>
    %78 = vector.shape_cast %77 : vector<1x32x128xf32> to vector<32x128xf32>
    %79 = vector.shape_cast %76 : vector<32x128xf32> to vector<1x32x128xf32>
    tpu.vector_store %arg8[%c0_39, %c0_40, %c0_41], %79 {strides = array<i32>} : memref<1x32x128xf32, #tpu.memory_space<vmem>>, vector<1x32x128xf32>,
    return
  }
  func.func @transform_0(%arg0: i32, %arg1: i32) -> (i32, i32, i32) {
    %c0_i32 = arith.constant 0 : i32
    %c0_i32_0 = arith.constant 0 : i32
    return %arg0, %c0_i32, %arg1 : i32, i32, i32
  }
  func.func @transform_1(%arg0: i32, %arg1: i32) -> (i32, i32, i32) {
    %c0_i32 = arith.constant 0 : i32
    %c0_i32_0 = arith.constant 0 : i32
    %c0_i32_1 = arith.constant 0 : i32
    return %arg0, %c0_i32, %c0_i32_0 : i32, i32, i32
  }
  func.func @transform_2(%arg0: i32, %arg1: i32) -> (i32, i32) {
    %c0_i32 = arith.constant 0 : i32
    %c0_i32_0 = arith.constant 0 : i32
    %c0_i32_1 = arith.constant 0 : i32
    return %c0_i32, %c0_i32_0 : i32, i32
  }
  func.func @transform_3(%arg0: i32, %arg1: i32) -> (i32, i32) {
    %c0_i32 = arith.constant 0 : i32
    %c0_i32_0 = arith.constant 0 : i32
    %c0_i32_1 = arith.constant 0 : i32
    return %c0_i32, %c0_i32_0 : i32, i32
  }
  func.func @transform_4(%arg0: i32, %arg1: i32) -> (i32, i32) {
    %c0_i32 = arith.constant 0 : i32
    %c0_i32_0 = arith.constant 0 : i32
    %c0_i32_1 = arith.constant 0 : i32
    return %c0_i32, %c0_i32_0 : i32, i32
  }
  func.func @transform_5(%arg0: i32, %arg1: i32) -> (i32, i32) {
    %c0_i32 = arith.constant 0 : i32
    %c0_i32_0 = arith.constant 0 : i32
    %c0_i32_1 = arith.constant 0 : i32
    return %c0_i32, %c0_i32_0 : i32, i32
  }
  func.func @transform_6(%arg0: i32, %arg1: i32) -> (i32, i32, i32) {
    %c0_i32 = arith.constant 0 : i32
    %c0_i32_0 = arith.constant 0 : i32
    return %arg0, %c0_i32, %arg1 : i32, i32, i32
  }
}

</mosaic_0001>

<llo_original>
// kernel: efficient_self_attention.1
$region0: #{efficient_self_attention.1}
  #allocation0 [shape = 'u32[]', space=smem, size = 0x4, offset = 0x4, fixed_abs, tag = 'smem constant byte address 0x4 - core index']
  #allocation1 [shape = 'u32[144,128]{1,0:T(1,128)}', space=vmem, size = 0x12000, scoped, tag = 'internal scratch']
  #allocation2 [shape = 'f32[32,128]{1,0:T(8,128)}', space=vmem, size = 0x4000, scoped, tag = 'scratch operand']
  %s0 = inlined_call_operand.vmem [shape: f32[2,32,256], index: 0, kind: input, shape index: {}]
  %s1 = inlined_call_operand.vmem [shape: f32[2,128,64], index: 1, kind: input, shape index: {}]
  %s2 = inlined_call_operand.vmem [shape: f32[32,32], index: 2, kind: input, shape index: {}]
  %s3 = inlined_call_operand.vmem [shape: f32[32,128], index: 3, kind: input, shape index: {}]
  %s4 = inlined_call_operand.vmem [shape: f32[32,128], index: 4, kind: input, shape index: {}]
  %s5 = inlined_call_operand.vmem [shape: f32[32,32], index: 5, kind: input, shape index: {}]
  %s6 = inlined_call_operand.vmem [shape: f32[2,32,256], index: 6, kind: output, shape index: {}]
  %s7 = sld [smem:[#allocation0]]
  $region129: #{efficient_self_attention.1} parent=0
    _
  %s9 = ssub.s32 1, %s7
  %s10 = scalar_select 0, %s9, %s7
  $region1: #{efficient_self_attention.1} parent=0
    #allocation3 [shape = 'u8[32768]{0}', space=vmem, size = 0x8000, scoped, tag = 'input window, operand 0']
    #allocation4 [shape = 'u8[32768]{0}', space=vmem, size = 0x8000, scoped, tag = 'output window, operand 0']
    loop: start=0, step=1, limit=6
    $region2: #{efficient_self_attention.1} parent=1 // loop_pre_header
      _
    $region3: #{efficient_self_attention.1} parent=1 // loop_header
      %s12 = sphi 0, %s16
      %p13 = scmp.ge.s32.totalorder %s12, 6
      %s19 = sphi 0, %s31
      %s20 = sphi 0, %s27
      %s21 = sphi 0, %s19
      %s22 = sphi 0, %s20
      %s23 = sphi 0, %s21
      %s24 = sphi 0, %s22
      %s36 = sphi 0, %s38
      %s39 = sphi 0, %s36
      %s40 = sphi 0, %s39
      %s56 = sphi 0, %s40
      %s62 = sphi 0, %s64
      %s65 = sphi 0, %s62
      %s66 = sphi 0, %s65
      %s82 = sphi 0, %s66
      %s86 = sphi 0, %s86
      %s88 = sphi 0, %s86
      %s89 = sphi 0, %s88
      %s103 = sphi 0, %s89
      %s107 = sphi 0, %s107
      %s109 = sphi 0, %s107
      %s110 = sphi 0, %s109
      %s124 = sphi 0, %s110
      %s128 = sphi 0, %s128
      %s130 = sphi 0, %s128
      %s131 = sphi 0, %s130
      %s145 = sphi 0, %s131
      %s149 = sphi 0, %s149
      %s151 = sphi 0, %s149
      %s152 = sphi 0, %s151
      %s166 = sphi 0, %s152
      %s174 = sphi 0, %s176
      %s177 = sphi 0, %s174
      %s178 = sphi 0, %s177
      %s194 = sphi 0, %s178
    $region4: #{efficient_self_attention.1} parent=1 // loop_header_branch
      %15 = sbr.rel (%p13) target = $region8
    $region5: #{efficient_self_attention.1} parent=1 // loop_body
      %s17 = ssub.s32 %s12, 1
      %s18 = ssub.s32 %s12, 2
      %s25 = sadd.s32 1, %s20
      %p26 = scmp.ge.s32.totalorder %s25, 2
      %s27 = scalar_select %p26, 0, %s25
      %s28 = sadd.s32 1, %s19
      %s29 = scalar_select %p26, %s28, %s19
      %p30 = scmp.ge.s32.totalorder %s29, 2
      %s31 = scalar_select %p30, 0, %s29
      %s32 = ssub.s32 %s19, %s31
      %s33 = ssub.s32 %s20, %s27
      %s34 = sor.u32 %s32, %s33
      %p35 = scmp.eq.s32.totalorder %s34, 0
      %s37 = sadd.s32 %s36, 1
      %s38 = scalar_select %p35, %s36, %s37
      %p41 = pneg %p35
      %p42 = scmp.eq.s32.totalorder %s12, 3
      %p43 = por %p41, %p42
      %p44 = scmp.ne.s32.totalorder %s36, %s39
      %p45 = scmp.eq.s32.totalorder %s12, 0
      %p46 = por %p44, %p45
      %p47 = scmp.ne.s32.totalorder %s36, %s39
      %p48 = scmp.eq.s32.totalorder %s17, 3
      %p49 = por %p47, %p48
      %p50 = scmp.ne.s32.totalorder %s39, %s40
      %p51 = scmp.eq.s32.totalorder %s17, 0
      %p52 = por %p50, %p51
      %p53 = scmp.ne.s32.totalorder %s39, %s40
      %p54 = scmp.eq.s32.totalorder %s18, 3
      %p55 = por %p53, %p54
      %p57 = scmp.ne.s32.totalorder %s40, %s56
      %p58 = scmp.eq.s32.totalorder %s18, 0
      %p59 = por %p57, %p58
      %s60 = ssub.s32 %s19, %s31
      %p61 = scmp.eq.s32.totalorder %s60, 0
      %s63 = sadd.s32 %s62, 1
      %s64 = scalar_select %p61, %s62, %s63
      %p67 = pneg %p61
      %p68 = scmp.eq.s32.totalorder %s12, 3
      %p69 = por %p67, %p68
      %p70 = scmp.ne.s32.totalorder %s62, %s65
      %p71 = scmp.eq.s32.totalorder %s12, 0
      %p72 = por %p70, %p71
      %p73 = scmp.ne.s32.totalorder %s62, %s65
      %p74 = scmp.eq.s32.totalorder %s17, 3
      %p75 = por %p73, %p74
      %p76 = scmp.ne.s32.totalorder %s65, %s66
      %p77 = scmp.eq.s32.totalorder %s17, 0
      %p78 = por %p76, %p77
      %p79 = scmp.ne.s32.totalorder %s65, %s66
      %p80 = scmp.eq.s32.totalorder %s18, 3
      %p81 = por %p79, %p80
      %p83 = scmp.ne.s32.totalorder %s66, %s82
      %p84 = scmp.eq.s32.totalorder %s18, 0
      %p85 = por %p83, %p84
      %s87 = sadd.s32 %s86, 1
      %p90 = scmp.eq.s32.totalorder %s12, 3
      %p91 = scmp.ne.s32.totalorder %s86, %s88
      %p92 = scmp.eq.s32.totalorder %s12, 0
      %p93 = por %p91, %p92
      %p94 = scmp.ne.s32.totalorder %s86, %s88
      %p95 = scmp.eq.s32.totalorder %s17, 3
      %p96 = por %p94, %p95
      %p97 = scmp.ne.s32.totalorder %s88, %s89
      %p98 = scmp.eq.s32.totalorder %s17, 0
      %p99 = por %p97, %p98
      %p100 = scmp.ne.s32.totalorder %s88, %s89
      %p101 = scmp.eq.s32.totalorder %s18, 3
      %p102 = por %p100, %p101
      %p104 = scmp.ne.s32.totalorder %s89, %s103
      %p105 = scmp.eq.s32.totalorder %s18, 0
      %p106 = por %p104, %p105
      %s108 = sadd.s32 %s107, 1
      %p111 = scmp.eq.s32.totalorder %s12, 3
      %p112 = scmp.ne.s32.totalorder %s107, %s109
      %p113 = scmp.eq.s32.totalorder %s12, 0
      %p114 = por %p112, %p113
      %p115 = scmp.ne.s32.totalorder %s107, %s109
      %p116 = scmp.eq.s32.totalorder %s17, 3
      %p117 = por %p115, %p116
      %p118 = scmp.ne.s32.totalorder %s109, %s110
      %p119 = scmp.eq.s32.totalorder %s17, 0
      %p120 = por %p118, %p119
      %p121 = scmp.ne.s32.totalorder %s109, %s110
      %p122 = scmp.eq.s32.totalorder %s18, 3
      %p123 = por %p121, %p122
      %p125 = scmp.ne.s32.totalorder %s110, %s124
      %p126 = scmp.eq.s32.totalorder %s18, 0
      %p127 = por %p125, %p126
      %s129 = sadd.s32 %s128, 1
      %p132 = scmp.eq.s32.totalorder %s12, 3
      %p133 = scmp.ne.s32.totalorder %s128, %s130
      %p134 = scmp.eq.s32.totalorder %s12, 0
      %p135 = por %p133, %p134
      %p136 = scmp.ne.s32.totalorder %s128, %s130
      %p137 = scmp.eq.s32.totalorder %s17, 3
      %p138 = por %p136, %p137
      %p139 = scmp.ne.s32.totalorder %s130, %s131
      %p140 = scmp.eq.s32.totalorder %s17, 0
      %p141 = por %p139, %p140
      %p142 = scmp.ne.s32.totalorder %s130, %s131
      %p143 = scmp.eq.s32.totalorder %s18, 3
      %p144 = por %p142, %p143
      %p146 = scmp.ne.s32.totalorder %s131, %s145
      %p147 = scmp.eq.s32.totalorder %s18, 0
      %p148 = por %p146, %p147
      %s150 = sadd.s32 %s149, 1
      %p153 = scmp.eq.s32.totalorder %s12, 3
      %p154 = scmp.ne.s32.totalorder %s149, %s151
      %p155 = scmp.eq.s32.totalorder %s12, 0
      %p156 = por %p154, %p155
      %p157 = scmp.ne.s32.totalorder %s149, %s151
      %p158 = scmp.eq.s32.totalorder %s17, 3
      %p159 = por %p157, %p158
      %p160 = scmp.ne.s32.totalorder %s151, %s152
      %p161 = scmp.eq.s32.totalorder %s17, 0
      %p162 = por %p160, %p161
      %p163 = scmp.ne.s32.totalorder %s151, %s152
      %p164 = scmp.eq.s32.totalorder %s18, 3
      %p165 = por %p163, %p164
      %p167 = scmp.ne.s32.totalorder %s152, %s166
      %p168 = scmp.eq.s32.totalorder %s18, 0
      %p169 = por %p167, %p168
      %s170 = ssub.s32 %s19, %s31
      %s171 = ssub.s32 %s20, %s27
      %s172 = sor.u32 %s170, %s171
      %p173 = scmp.eq.s32.totalorder %s172, 0
      %s175 = sadd.s32 %s174, 1
      %s176 = scalar_select %p173, %s174, %s175
      %p179 = pneg %p173
      %p180 = scmp.eq.s32.totalorder %s12, 3
      %p181 = por %p179, %p180
      %p182 = scmp.ne.s32.totalorder %s174, %s177
      %p183 = scmp.eq.s32.totalorder %s12, 0
      %p184 = por %p182, %p183
      %p185 = scmp.ne.s32.totalorder %s174, %s177
      %p186 = scmp.eq.s32.totalorder %s17, 3
      %p187 = por %p185, %p186
      %p188 = scmp.ne.s32.totalorder %s177, %s178
      %p189 = scmp.eq.s32.totalorder %s17, 0
      %p190 = por %p188, %p189
      %p191 = scmp.ne.s32.totalorder %s177, %s178
      %p192 = scmp.eq.s32.totalorder %s18, 3
      %p193 = por %p191, %p192
      %p195 = scmp.ne.s32.totalorder %s178, %s194
      %p196 = scmp.eq.s32.totalorder %s18, 0
      %p197 = por %p195, %p196
      %p198 = scmp.le.s32.totalorder 1, %s12
      %p199 = scmp.lt.s32.totalorder %s12, 5
      %p200 = pnand %p198, %p199
      %p201 = pneg %p200
      // Predicated region
      $region9: #{efficient_self_attention.1} parent=5 // pred_check
        _
      $region10: #{efficient_self_attention.1} parent=5 // pred_check_branch
        %203 = sbr.rel (%p200) target = $region12
      $region11: #{efficient_self_attention.1} parent=5 // pred_region
        %s204 = ssub.s32 %s12, 1
        // Predicated region
        $region13: #{efficient_self_attention.1} parent=11 // pred_check
          %p205 = pneg %p99
        $region14: #{efficient_self_attention.1} parent=11 // pred_check_branch
          %207 = sbr.rel (%p205) target = $region16
        $region15: #{efficient_self_attention.1} parent=11 // pred_region
          _
        $region16: #{efficient_self_attention.1} parent=11 // pred_fallthru
          _
        // Predicated region
        $region17: #{efficient_self_attention.1} parent=11 // pred_check
          %p208 = pneg %p120
        $region18: #{efficient_self_attention.1} parent=11 // pred_check_branch
          %210 = sbr.rel (%p208) target = $region20
        $region19: #{efficient_self_attention.1} parent=11 // pred_region
          _
        $region20: #{efficient_self_attention.1} parent=11 // pred_fallthru
          _
        // Predicated region
        $region21: #{efficient_self_attention.1} parent=11 // pred_check
          %p211 = pneg %p141
        $region22: #{efficient_self_attention.1} parent=11 // pred_check_branch
          %213 = sbr.rel (%p211) target = $region24
        $region23: #{efficient_self_attention.1} parent=11 // pred_region
          _
        $region24: #{efficient_self_attention.1} parent=11 // pred_fallthru
          _
        // Predicated region
        $region25: #{efficient_self_attention.1} parent=11 // pred_check
          %p214 = pneg %p162
        $region26: #{efficient_self_attention.1} parent=11 // pred_check_branch
          %216 = sbr.rel (%p214) target = $region28
        $region27: #{efficient_self_attention.1} parent=11 // pred_region
          _
        $region28: #{efficient_self_attention.1} parent=11 // pred_fallthru
          _
      $region12: #{efficient_self_attention.1} parent=5 // pred_fallthru
        _
      %p217 = scmp.lt.s32.totalorder %s12, 4
      // Predicated region
      $region29: #{efficient_self_attention.1} parent=5 // pred_check
        %p218 = pneg %p217
      $region30: #{efficient_self_attention.1} parent=5 // pred_check_branch
        %220 = sbr.rel (%p218) target = $region32
      $region31: #{efficient_self_attention.1} parent=5 // pred_region
        // Predicated region
        $region33: #{efficient_self_attention.1} parent=31 // pred_check
          %p221 = pneg %p46
        $region34: #{efficient_self_attention.1} parent=31 // pred_check_branch
          %223 = sbr.rel (%p221) target = $region36
        $region35: #{efficient_self_attention.1} parent=31 // pred_region
          %s224 = sand.u32 %s36, 1
          %s225 = sand.u32 %s36, 1
          %s226 = smul.addr %s225, 32
          %s227 = scalar_lea.vmem [#allocation3], %s226
          %s228 = smul.addr %s19, 8
          %s229 = sadd.s32 %s20, %s228
          %s230 = smul.addr %s229, 8
          %s231 = scalar_lea.vmem %s0, %s230
          // Predicated region
          $region37: #{efficient_self_attention.1} parent=35 // pred_check
            _
          $region38: #{efficient_self_attention.1} parent=35 // pred_check_branch
            %233 = sbr.rel (0) target = $region40
          $region39: #{efficient_self_attention.1} parent=35 // pred_region
            // Predicated region
            $region41: #{efficient_self_attention.1} parent=39 // pred_check
              _
            $region42: #{efficient_self_attention.1} parent=39 // pred_check_branch
              %235 = sbr.rel (0) target = $region44
            $region43: #{efficient_self_attention.1} parent=39 // pred_region
              // Predicated region
              $region56: #{efficient_self_attention.1} parent=43 // pred_check
                _
              $region57: #{efficient_self_attention.1} parent=43 // pred_check_branch
                %257 = sbr.rel (0) target = $region59
              $region58: #{efficient_self_attention.1} parent=43 // pred_region
                loop: start=0, step=1, limit=1
                $region60: #{efficient_self_attention.1} parent=58 // loop_pre_header
                  _
                $region61: #{efficient_self_attention.1} parent=58 // loop_header
                  %s259 = sphi 0, %s263
                  %p260 = scmp.ge.s32.totalorder %s259, 1
                  %s264 = sphi %s231, %s231
                  %s265 = sphi %s227, %s227
                $region62: #{efficient_self_attention.1} parent=58 // loop_header_branch
                  %262 = sbr.rel (%p260) target = $region66
                $region63: #{efficient_self_attention.1} parent=58 // loop_body
                  %v266 = vld [vmem:[%s264] sm:$0xff]
                  %267 = vst [vmem:[%s265] sm:$0xff] %v266
                  %v268 = vld [vmem:[%s264 + $0x10] sm:$0xff]
                  %269 = vst [vmem:[%s265 + $0x8] sm:$0xff] %v268
                  %v270 = vld [vmem:[%s264 + $0x20] sm:$0xff]
                  %271 = vst [vmem:[%s265 + $0x10] sm:$0xff] %v270
                  %v272 = vld [vmem:[%s264 + $0x30] sm:$0xff]
                  %273 = vst [vmem:[%s265 + $0x18] sm:$0xff] %v272
                $region64: #{efficient_self_attention.1} parent=58 // loop_footer
                  %s263 = sadd.s32 1, %s259
                $region65: #{efficient_self_attention.1} parent=58 // loop_footer_branch
                  %258 = sbr.rel target = $region61
                $region66: #{efficient_self_attention.1} parent=58 // loop_exit
                  _
              $region59: #{efficient_self_attention.1} parent=43 // pred_fallthru
                _
              // Predicated region
              $region67: #{efficient_self_attention.1} parent=43 // pred_check
                _
              $region68: #{efficient_self_attention.1} parent=43 // pred_check_branch
                %275 = sbr.rel target = $region70
              $region69: #{efficient_self_attention.1} parent=43 // pred_region
                _
              $region70: #{efficient_self_attention.1} parent=43 // pred_fallthru
                _
            $region44: #{efficient_self_attention.1} parent=39 // pred_fallthru
              _
            // Predicated region
            $region45: #{efficient_self_attention.1} parent=39 // pred_check
              _
            $region46: #{efficient_self_attention.1} parent=39 // pred_check_branch
              %237 = sbr.rel target = $region48
            $region47: #{efficient_self_attention.1} parent=39 // pred_region
              %s239 = ssub.s32 256, 1
              loop: start=0, step=1, limit=1
              $region49: #{efficient_self_attention.1} parent=47 // loop_pre_header
                _
              $region50: #{efficient_self_attention.1} parent=47 // loop_header
                %s241 = sphi 0, %s245
                %p242 = scmp.ge.s32.totalorder %s241, 1
                %s246 = sphi %s231, %s231
                %s247 = sphi %s227, %s227
              $region51: #{efficient_self_attention.1} parent=47 // loop_header_branch
                %244 = sbr.rel (%p242) target = $region55
              $region52: #{efficient_self_attention.1} parent=47 // loop_body
                %v248 = vld [vmem:[%s246] sm:%s239]
                %249 = vst [vmem:[%s247] sm:%s239] %v248
                %v250 = vld [vmem:[%s246 + $0x10] sm:%s239]
                %251 = vst [vmem:[%s247 + $0x8] sm:%s239] %v250
                %v252 = vld [vmem:[%s246 + $0x20] sm:%s239]
                %253 = vst [vmem:[%s247 + $0x10] sm:%s239] %v252
                %v254 = vld [vmem:[%s246 + $0x30] sm:%s239]
                %255 = vst [vmem:[%s247 + $0x18] sm:%s239] %v254
              $region53: #{efficient_self_attention.1} parent=47 // loop_footer
                %s245 = sadd.s32 1, %s241
              $region54: #{efficient_self_attention.1} parent=47 // loop_footer_branch
                %240 = sbr.rel target = $region50
              $region55: #{efficient_self_attention.1} parent=47 // loop_exit
                _
            $region48: #{efficient_self_attention.1} parent=39 // pred_fallthru
              _
          $region40: #{efficient_self_attention.1} parent=35 // pred_fallthru
            _
          %276 = vnop
        $region36: #{efficient_self_attention.1} parent=31 // pred_fallthru
          _
        // Predicated region
        $region71: #{efficient_self_attention.1} parent=31 // pred_check
          %p277 = pneg %p72
        $region72: #{efficient_self_attention.1} parent=31 // pred_check_branch
          %279 = sbr.rel (%p277) target = $region74
        $region73: #{efficient_self_attention.1} parent=31 // pred_region
          %p280 = scmp.lt.s32.totalorder %s19, 1
          %s281 = scalar_select %p280, %s19, 1
          %s282 = smul.addr %s281, 16
          %s283 = smul.addr %s282, 8
          %s284 = scalar_lea.vmem %s1, %s283
        $region74: #{efficient_self_attention.1} parent=31 // pred_fallthru
          _
      $region32: #{efficient_self_attention.1} parent=5 // pred_fallthru
        _
      %p285 = scmp.le.s32.totalorder 1, %s12
      %p286 = scmp.lt.s32.totalorder %s12, 5
      %p287 = pnand %p285, %p286
      %p288 = pneg %p287
      // Predicated region
      $region75: #{efficient_self_attention.1} parent=5 // pred_check
        _
      $region76: #{efficient_self_attention.1} parent=5 // pred_check_branch
        %290 = sbr.rel (%p287) target = $region78
      $region77: #{efficient_self_attention.1} parent=5 // pred_region
        %s291 = ssub.s32 %s12, 1
        %s292 = sand.u32 %s39, 1
        %s293 = sand.u32 %s39, 1
        %s294 = smul.addr %s293, 32
        %s295 = scalar_lea.vmem [#allocation3], %s294
        // Predicated region
        $region79: #{efficient_self_attention.1} parent=77 // pred_check
          %p296 = pneg %p52
        $region80: #{efficient_self_attention.1} parent=77 // pred_check_branch
          %298 = sbr.rel (%p296) target = $region82
        $region81: #{efficient_self_attention.1} parent=77 // pred_region
          _
        $region82: #{efficient_self_attention.1} parent=77 // pred_fallthru
          _
        %s299 = sand.u32 %s39, 1
        %s300 = sand.u32 %s39, 1
        %s301 = smul.addr %s300, 32
        %s302 = scalar_lea.vmem [#allocation3], %s301
        %p303 = pneg %p52
        %p304 = pneg %p49
        %p305 = scmp.lt.s32.totalorder %s21, 1
        %s306 = scalar_select %p305, %s21, 1
        %s307 = smul.addr %s306, 16
        %s308 = smul.addr %s307, 8
        %s309 = scalar_lea.vmem %s1, %s308
        %p310 = pneg %p78
        %p311 = pneg %p75
        %p312 = pneg %p99
        %p313 = pneg %p96
        %p314 = pneg %p120
        %p315 = pneg %p117
        %p316 = pneg %p141
        %p317 = pneg %p138
        %p318 = pneg %p162
        %p319 = pneg %p159
        %p320 = pneg %p190
        %p321 = pneg %p187
        %s322 = sand.u32 %s177, 1
        %s323 = sand.u32 %s177, 1
        %s324 = smul.addr %s323, 32
        %s325 = scalar_lea.vmem [#allocation4], %s324
        %p326 = scmp.lt.s32.totalorder %s21, 1
        %s327 = scalar_select %p326, %s21, 1
        %s328 = smul.addr %s327, 16
        %s329 = smul.addr %s328, 8
        %s330 = scalar_lea.vmem %s1, %s329
        %v331 = vld [vmem:[%s295] sm:$0xff]
        %v332 = vld [vmem:[%s295 + $0x8] sm:$0xff]
        %v333 = vld [vmem:[%s295 + $0x10] sm:$0xff]
        %v334 = vld [vmem:[%s295 + $0x18] sm:$0xff]
        %v335 = vld [vmem:[%s330] sm:$0xff]
        %v336 = vld [vmem:[%s330 + $0x8] sm:$0xff]
        %v337 = vld [vmem:[%s330 + $0x10] sm:$0xff]
        %v338 = vld [vmem:[%s330 + $0x18] sm:$0xff]
        %v339 = vld [vmem:[%s330 + $0x20] sm:$0xff]
        %v340 = vld [vmem:[%s330 + $0x28] sm:$0xff]
        %v341 = vld [vmem:[%s330 + $0x30] sm:$0xff]
        %v342 = vld [vmem:[%s330 + $0x38] sm:$0xff]
        %v343 = vld [vmem:[%s330 + $0x40] sm:$0xff]
        %v344 = vld [vmem:[%s330 + $0x48] sm:$0xff]
        %v345 = vld [vmem:[%s330 + $0x50] sm:$0xff]
        %v346 = vld [vmem:[%s330 + $0x58] sm:$0xff]
        %v347 = vld [vmem:[%s330 + $0x60] sm:$0xff]
        %v348 = vld [vmem:[%s330 + $0x68] sm:$0xff]
        %v349 = vld [vmem:[%s330 + $0x70] sm:$0xff]
        %v350 = vld [vmem:[%s330 + $0x78] sm:$0xff]
        %v351 = vld [vmem:[%s2] sm:$0xff]
        %v352 = vld [vmem:[%s2 + $0x8] sm:$0xff]
        %v353 = vld [vmem:[%s2 + $0x10] sm:$0xff]
        %v354 = vld [vmem:[%s2 + $0x18] sm:$0xff]
        %vm355 = vcmask 261120
        %v357 = vsel %vm355, %v351, 0
        %v360 = vsel %vm355, %v352, 0
        %v363 = vsel %vm355, %v353, 0
        %v366 = vsel %vm355, %v354, 0
        %368 = vmatprep.subr.mxu0 0.0
        %369 = vmatpush1.msra.mxu0 0.0
        %370 = vmatprep.subr.mxu0 0.0
        %371 = vmatpush1.msra.mxu0 0.0
        %372 = vmatprep.subr.mxu0 0.0
        %373 = vmatpush1.msra.mxu0 0.0
        %374 = vmatprep.subr.mxu0 0.0
        %375 = vmatpush1.msra.mxu0 0.0
        %376 = vmatprep.subr.mxu0 0.0
        %377 = vmatpush1.msra.mxu0 0.0
        %378 = vmatprep.subr.mxu0 0.0
        %379 = vmatpush1.msra.mxu0 0.0
        %380 = vmatprep.subr.mxu0 0.0
        %381 = vmatpush1.msra.mxu0 0.0
        %382 = vmatprep.subr.mxu0 0.0
        %383 = vmatpush1.msra.mxu0 0.0
        %384 = vmatprep.subr.mxu0 0.0
        %385 = vmatpush1.msra.mxu0 0.0
        %386 = vmatprep.subr.mxu0 0.0
        %387 = vmatpush1.msra.mxu0 0.0
        %388 = vmatprep.subr.mxu0 0.0
        %389 = vmatpush1.msra.mxu0 0.0
        %390 = vmatprep.subr.mxu0 0.0
        %391 = vmatpush1.msra.mxu0 0.0
        %392 = vmatprep.subr.mxu0 0.0
        %393 = vmatpush1.msra.mxu0 %v334
        %394 = vmatprep.subr.mxu0 0.0
        %395 = vmatpush1.msra.mxu0 %v333
        %396 = vmatprep.subr.mxu0 0.0
        %397 = vmatpush1.msra.mxu0 %v332
        %398 = vmatprep.subr.mxu0 0.0
        %399 = vmatpush1.msra.mxu0 %v331
        %400 = vmatprep.subr.mxu0 0.0
        %401 = vmatpush2.msra.mxu0 0.0
        %402 = vmatprep.subr.mxu0 0.0
        %403 = vmatpush2.msra.mxu0 0.0
        %404 = vmatprep.subr.mxu0 0.0
        %405 = vmatpush2.msra.mxu0 0.0
        %406 = vmatprep.subr.mxu0 0.0
        %407 = vmatpush2.msra.mxu0 0.0
        %408 = vmatprep.subr.mxu0 0.0
        %409 = vmatpush2.msra.mxu0 0.0
        %410 = vmatprep.subr.mxu0 0.0
        %411 = vmatpush2.msra.mxu0 0.0
        %412 = vmatprep.subr.mxu0 0.0
        %413 = vmatpush2.msra.mxu0 0.0
        %414 = vmatprep.subr.mxu0 0.0
        %415 = vmatpush2.msra.mxu0 0.0
        %416 = vmatprep.subr.mxu0 0.0
        %417 = vmatpush2.msra.mxu0 0.0
        %418 = vmatprep.subr.mxu0 0.0
        %419 = vmatpush2.msra.mxu0 0.0
        %420 = vmatprep.subr.mxu0 0.0
        %421 = vmatpush2.msra.mxu0 0.0
        %422 = vmatprep.subr.mxu0 0.0
        %423 = vmatpush2.msra.mxu0 0.0
        %424 = vmatprep.subr.mxu0 0.0
        %425 = vmatpush2.msra.mxu0 0.0
        %426 = vmatprep.subr.mxu0 0.0
        %427 = vmatpush2.msra.mxu0 0.0
        %428 = vmatprep.subr.mxu0 0.0
        %429 = vmatpush2.msra.mxu0 0.0
        %430 = vmatprep.subr.mxu0 0.0
        %431 = vmatpush2.msra.mxu0 0.0
        %432 = vmatprep.mubr.f32.mxu0 0.0
        %433 = vmatmul.mubr.f32.gmra.mxu0 %v357
        %v434 = vpop.f32.mrf.mxu0
        %v435 = vadd.f32 0.0, %v434
        %v436 = vpop.f32.mrf.mxu0
        %437 = vmatprep.mubr.f32.mxu0 0.0
        %438 = vmatmul.mubr.f32.gmra.mxu0 %v360
        %v439 = vpop.f32.mrf.mxu0
        %v440 = vadd.f32 0.0, %v439
        %v441 = vpop.f32.mrf.mxu0
        %442 = vmatprep.mubr.f32.mxu0 0.0
        %443 = vmatmul.mubr.f32.gmra.mxu0 %v363
        %v444 = vpop.f32.mrf.mxu0
        %v445 = vadd.f32 0.0, %v444
        %v446 = vpop.f32.mrf.mxu0
        %447 = vmatprep.mubr.f32.mxu0 0.0
        %448 = vmatmul.mubr.f32.gmra.mxu0 %v366
        %v449 = vpop.f32.mrf.mxu0
        %v450 = vadd.f32 0.0, %v449
        %v451 = vpop.f32.mrf.mxu0
        %452 = vdwg.mxu0
        %v453 = vld [vmem:[%s3] sm:$0xff]
        %v454 = vld [vmem:[%s3 + $0x8] sm:$0xff]
        %v455 = vld [vmem:[%s3 + $0x10] sm:$0xff]
        %v456 = vld [vmem:[%s3 + $0x18] sm:$0xff]
        %457 = vmatprep.subr.mxu0 0.0
        %458 = vmatpush1.msra.mxu0 %v350
        %459 = vmatprep.subr.mxu0 0.0
        %460 = vmatpush1.msra.mxu0 %v349
        %461 = vmatprep.subr.mxu0 0.0
        %462 = vmatpush1.msra.mxu0 %v348
        %463 = vmatprep.subr.mxu0 0.0
        %464 = vmatpush1.msra.mxu0 %v347
        %465 = vmatprep.subr.mxu0 0.0
        %466 = vmatpush1.msra.mxu0 %v346
        %467 = vmatprep.subr.mxu0 0.0
        %468 = vmatpush1.msra.mxu0 %v345
        %469 = vmatprep.subr.mxu0 0.0
        %470 = vmatpush1.msra.mxu0 %v344
        %471 = vmatprep.subr.mxu0 0.0
        %472 = vmatpush1.msra.mxu0 %v343
        %473 = vmatprep.subr.mxu0 0.0
        %474 = vmatpush1.msra.mxu0 %v342
        %475 = vmatprep.subr.mxu0 0.0
        %476 = vmatpush1.msra.mxu0 %v341
        %477 = vmatprep.subr.mxu0 0.0
        %478 = vmatpush1.msra.mxu0 %v340
        %479 = vmatprep.subr.mxu0 0.0
        %480 = vmatpush1.msra.mxu0 %v339
        %481 = vmatprep.subr.mxu0 0.0
        %482 = vmatpush1.msra.mxu0 %v338
        %483 = vmatprep.subr.mxu0 0.0
        %484 = vmatpush1.msra.mxu0 %v337
        %485 = vmatprep.subr.mxu0 0.0
        %486 = vmatpush1.msra.mxu0 %v336
        %487 = vmatprep.subr.mxu0 0.0
        %488 = vmatpush1.msra.mxu0 %v335
        %489 = vmatprep.subr.mxu0 0.0
        %490 = vmatpush2.msra.mxu0 0.0
        %491 = vmatprep.subr.mxu0 0.0
        %492 = vmatpush2.msra.mxu0 0.0
        %493 = vmatprep.subr.mxu0 0.0
        %494 = vmatpush2.msra.mxu0 0.0
        %495 = vmatprep.subr.mxu0 0.0
        %496 = vmatpush2.msra.mxu0 0.0
        %497 = vmatprep.subr.mxu0 0.0
        %498 = vmatpush2.msra.mxu0 0.0
        %499 = vmatprep.subr.mxu0 0.0
        %500 = vmatpush2.msra.mxu0 0.0
        %501 = vmatprep.subr.mxu0 0.0
        %502 = vmatpush2.msra.mxu0 0.0
        %503 = vmatprep.subr.mxu0 0.0
        %504 = vmatpush2.msra.mxu0 0.0
        %505 = vmatprep.subr.mxu0 0.0
        %506 = vmatpush2.msra.mxu0 0.0
        %507 = vmatprep.subr.mxu0 0.0
        %508 = vmatpush2.msra.mxu0 0.0
        %509 = vmatprep.subr.mxu0 0.0
        %510 = vmatpush2.msra.mxu0 0.0
        %511 = vmatprep.subr.mxu0 0.0
        %512 = vmatpush2.msra.mxu0 0.0
        %513 = vmatprep.subr.mxu0 0.0
        %514 = vmatpush2.msra.mxu0 0.0
        %515 = vmatprep.subr.mxu0 0.0
        %516 = vmatpush2.msra.mxu0 0.0
        %517 = vmatprep.subr.mxu0 0.0
        %518 = vmatpush2.msra.mxu0 0.0
        %519 = vmatprep.subr.mxu0 0.0
        %520 = vmatpush2.msra.mxu0 0.0
        %521 = vmatprep.mubr.f32.mxu0 0.0
        %522 = vmatmul.mubr.f32.gmra.mxu0 %v453
        %v523 = vpop.f32.mrf.mxu0
        %v524 = vadd.f32 0.0, %v523
        %v525 = vpop.f32.mrf.mxu0
        %526 = vmatprep.mubr.f32.mxu0 0.0
        %527 = vmatmul.mubr.f32.gmra.mxu0 %v454
        %v528 = vpop.f32.mrf.mxu0
        %v529 = vadd.f32 0.0, %v528
        %v530 = vpop.f32.mrf.mxu0
        %531 = vmatprep.mubr.f32.mxu0 0.0
        %532 = vmatmul.mubr.f32.gmra.mxu0 %v455
        %v533 = vpop.f32.mrf.mxu0
        %v534 = vadd.f32 0.0, %v533
        %v535 = vpop.f32.mrf.mxu0
        %536 = vmatprep.mubr.f32.mxu0 0.0
        %537 = vmatmul.mubr.f32.gmra.mxu0 %v456
        %v538 = vpop.f32.mrf.mxu0
        %v539 = vadd.f32 0.0, %v538
        %v540 = vpop.f32.mrf.mxu0
        %541 = vdwg.mxu0
        %v542 = vld [vmem:[%s4] sm:$0xff]
        %v543 = vld [vmem:[%s4 + $0x8] sm:$0xff]
        %v544 = vld [vmem:[%s4 + $0x10] sm:$0xff]
        %v545 = vld [vmem:[%s4 + $0x18] sm:$0xff]
        %546 = vmatprep.subr.mxu0 0.0
        %547 = vmatpush1.msra.mxu0 %v350
        %548 = vmatprep.subr.mxu0 0.0
        %549 = vmatpush1.msra.mxu0 %v349
        %550 = vmatprep.subr.mxu0 0.0
        %551 = vmatpush1.msra.mxu0 %v348
        %552 = vmatprep.subr.mxu0 0.0
        %553 = vmatpush1.msra.mxu0 %v347
        %554 = vmatprep.subr.mxu0 0.0
        %555 = vmatpush1.msra.mxu0 %v346
        %556 = vmatprep.subr.mxu0 0.0
        %557 = vmatpush1.msra.mxu0 %v345
        %558 = vmatprep.subr.mxu0 0.0
        %559 = vmatpush1.msra.mxu0 %v344
        %560 = vmatprep.subr.mxu0 0.0
        %561 = vmatpush1.msra.mxu0 %v343
        %562 = vmatprep.subr.mxu0 0.0
        %563 = vmatpush1.msra.mxu0 %v342
        %564 = vmatprep.subr.mxu0 0.0
        %565 = vmatpush1.msra.mxu0 %v341
        %566 = vmatprep.subr.mxu0 0.0
        %567 = vmatpush1.msra.mxu0 %v340
        %568 = vmatprep.subr.mxu0 0.0
        %569 = vmatpush1.msra.mxu0 %v339
        %570 = vmatprep.subr.mxu0 0.0
        %571 = vmatpush1.msra.mxu0 %v338
        %572 = vmatprep.subr.mxu0 0.0
        %573 = vmatpush1.msra.mxu0 %v337
        %574 = vmatprep.subr.mxu0 0.0
        %575 = vmatpush1.msra.mxu0 %v336
        %576 = vmatprep.subr.mxu0 0.0
        %577 = vmatpush1.msra.mxu0 %v335
        %578 = vmatprep.subr.mxu0 0.0
        %579 = vmatpush2.msra.mxu0 0.0
        %580 = vmatprep.subr.mxu0 0.0
        %581 = vmatpush2.msra.mxu0 0.0
        %582 = vmatprep.subr.mxu0 0.0
        %583 = vmatpush2.msra.mxu0 0.0
        %584 = vmatprep.subr.mxu0 0.0
        %585 = vmatpush2.msra.mxu0 0.0
        %586 = vmatprep.subr.mxu0 0.0
        %587 = vmatpush2.msra.mxu0 0.0
        %588 = vmatprep.subr.mxu0 0.0
        %589 = vmatpush2.msra.mxu0 0.0
        %590 = vmatprep.subr.mxu0 0.0
        %591 = vmatpush2.msra.mxu0 0.0
        %592 = vmatprep.subr.mxu0 0.0
        %593 = vmatpush2.msra.mxu0 0.0
        %594 = vmatprep.subr.mxu0 0.0
        %595 = vmatpush2.msra.mxu0 0.0
        %596 = vmatprep.subr.mxu0 0.0
        %597 = vmatpush2.msra.mxu0 0.0
        %598 = vmatprep.subr.mxu0 0.0
        %599 = vmatpush2.msra.mxu0 0.0
        %600 = vmatprep.subr.mxu0 0.0
        %601 = vmatpush2.msra.mxu0 0.0
        %602 = vmatprep.subr.mxu0 0.0
        %603 = vmatpush2.msra.mxu0 0.0
        %604 = vmatprep.subr.mxu0 0.0
        %605 = vmatpush2.msra.mxu0 0.0
        %606 = vmatprep.subr.mxu0 0.0
        %607 = vmatpush2.msra.mxu0 0.0
        %608 = vmatprep.subr.mxu0 0.0
        %609 = vmatpush2.msra.mxu0 0.0
        %610 = vmatprep.mubr.f32.mxu0 0.0
        %611 = vmatmul.mubr.f32.gmra.mxu0 %v542
        %v612 = vpop.f32.mrf.mxu0
        %v613 = vadd.f32 0.0, %v612
        %v614 = vpop.f32.mrf.mxu0
        %615 = vmatprep.mubr.f32.mxu0 0.0
        %616 = vmatmul.mubr.f32.gmra.mxu0 %v543
        %v617 = vpop.f32.mrf.mxu0
        %v618 = vadd.f32 0.0, %v617
        %v619 = vpop.f32.mrf.mxu0
        %620 = vmatprep.mubr.f32.mxu0 0.0
        %621 = vmatmul.mubr.f32.gmra.mxu0 %v544
        %v622 = vpop.f32.mrf.mxu0
        %v623 = vadd.f32 0.0, %v622
        %v624 = vpop.f32.mrf.mxu0
        %625 = vmatprep.mubr.f32.mxu0 0.0
        %626 = vmatmul.mubr.f32.gmra.mxu0 %v545
        %v627 = vpop.f32.mrf.mxu0
        %v628 = vadd.f32 0.0, %v627
        %v629 = vpop.f32.mrf.mxu0
        %630 = vdwg.mxu0
        %631 = vxpose.xlu0.b32.start [1/16] %v524, 128
        %632 = vxpose.xlu0.b32.cont [2/16] 0.0, 128
        %633 = vxpose.xlu0.b32.cont [3/16] 0.0, 128
        %634 = vxpose.xlu0.b32.cont [4/16] 0.0, 128
        %635 = vxpose.xlu0.b32.cont [5/16] 0.0, 128
        %636 = vxpose.xlu0.b32.cont [6/16] 0.0, 128
        %637 = vxpose.xlu0.b32.cont [7/16] 0.0, 128
        %638 = vxpose.xlu0.b32.cont [8/16] 0.0, 128
        %639 = vxpose.xlu0.b32.cont [9/16] 0.0, 128
        %640 = vxpose.xlu0.b32.cont [10/16] 0.0, 128
        %641 = vxpose.xlu0.b32.cont [11/16] 0.0, 128
        %642 = vxpose.xlu0.b32.cont [12/16] 0.0, 128
        %643 = vxpose.xlu0.b32.cont [13/16] 0.0, 128
        %644 = vxpose.xlu0.b32.cont [14/16] 0.0, 128
        %645 = vxpose.xlu0.b32.cont [15/16] 0.0, 128
        %646 = vxpose.xlu0.b32.end [16/16] 0.0, 128
        %v647 = vpop.trf.xlu0
        %v648 = vpop.trf.xlu0
        %v649 = vpop.trf.xlu0
        %v650 = vpop.trf.xlu0
        %v651 = vpop.trf.xlu0
        %v652 = vpop.trf.xlu0
        %v653 = vpop.trf.xlu0
        %v654 = vpop.trf.xlu0
        %v655 = vpop.trf.xlu0
        %v656 = vpop.trf.xlu0
        %v657 = vpop.trf.xlu0
        %v658 = vpop.trf.xlu0
        %v659 = vpop.trf.xlu0
        %v660 = vpop.trf.xlu0
        %v661 = vpop.trf.xlu0
        %v662 = vpop.trf.xlu0
        %vm663 = vcmask 64512
        %v665 = vsel %vm663, %v647, 0
        %v668 = vsel %vm663, %v648, 0
        %v671 = vsel %vm663, %v649, 0
        %v674 = vsel %vm663, %v650, 0
        %v677 = vsel %vm663, %v651, 0
        %v680 = vsel %vm663, %v652, 0
        %v683 = vsel %vm663, %v653, 0
        %v686 = vsel %vm663, %v654, 0
        %688 = vmatprep.subr.mxu0 0.0
        %689 = vmatpush1.msra.mxu0 0.0
        %690 = vmatprep.subr.mxu0 0.0
        %691 = vmatpush1.msra.mxu0 0.0
        %692 = vmatprep.subr.mxu0 0.0
        %693 = vmatpush1.msra.mxu0 0.0
        %694 = vmatprep.subr.mxu0 0.0
        %695 = vmatpush1.msra.mxu0 0.0
        %696 = vmatprep.subr.mxu0 0.0
        %697 = vmatpush1.msra.mxu0 0.0
        %698 = vmatprep.subr.mxu0 0.0
        %699 = vmatpush1.msra.mxu0 0.0
        %700 = vmatprep.subr.mxu0 0.0
        %701 = vmatpush1.msra.mxu0 0.0
        %702 = vmatprep.subr.mxu0 0.0
        %703 = vmatpush1.msra.mxu0 0.0
        %704 = vmatprep.subr.mxu0 0.0
        %705 = vmatpush1.msra.mxu0 0.0
        %706 = vmatprep.subr.mxu0 0.0
        %707 = vmatpush1.msra.mxu0 0.0
        %708 = vmatprep.subr.mxu0 0.0
        %709 = vmatpush1.msra.mxu0 0.0
        %710 = vmatprep.subr.mxu0 0.0
        %711 = vmatpush1.msra.mxu0 0.0
        %712 = vmatprep.subr.mxu0 0.0
        %713 = vmatpush1.msra.mxu0 0.0
        %714 = vmatprep.subr.mxu0 0.0
        %715 = vmatpush1.msra.mxu0 0.0
        %716 = vmatprep.subr.mxu0 0.0
        %717 = vmatpush1.msra.mxu0 0.0
        %718 = vmatprep.subr.mxu0 0.0
        %719 = vmatpush1.msra.mxu0 %v435
        %720 = vmatprep.subr.mxu0 0.0
        %721 = vmatpush2.msra.mxu0 0.0
        %722 = vmatprep.subr.mxu0 0.0
        %723 = vmatpush2.msra.mxu0 0.0
        %724 = vmatprep.subr.mxu0 0.0
        %725 = vmatpush2.msra.mxu0 0.0
        %726 = vmatprep.subr.mxu0 0.0
        %727 = vmatpush2.msra.mxu0 0.0
        %728 = vmatprep.subr.mxu0 0.0
        %729 = vmatpush2.msra.mxu0 0.0
        %730 = vmatprep.subr.mxu0 0.0
        %731 = vmatpush2.msra.mxu0 0.0
        %732 = vmatprep.subr.mxu0 0.0
        %733 = vmatpush2.msra.mxu0 0.0
        %734 = vmatprep.subr.mxu0 0.0
        %735 = vmatpush2.msra.mxu0 0.0
        %736 = vmatprep.subr.mxu0 0.0
        %737 = vmatpush2.msra.mxu0 0.0
        %738 = vmatprep.subr.mxu0 0.0
        %739 = vmatpush2.msra.mxu0 0.0
        %740 = vmatprep.subr.mxu0 0.0
        %741 = vmatpush2.msra.mxu0 0.0
        %742 = vmatprep.subr.mxu0 0.0
        %743 = vmatpush2.msra.mxu0 0.0
        %744 = vmatprep.subr.mxu0 0.0
        %745 = vmatpush2.msra.mxu0 0.0
        %746 = vmatprep.subr.mxu0 0.0
        %747 = vmatpush2.msra.mxu0 0.0
        %748 = vmatprep.subr.mxu0 0.0
        %749 = vmatpush2.msra.mxu0 0.0
        %750 = vmatprep.subr.mxu0 0.0
        %751 = vmatpush2.msra.mxu0 0.0
        %752 = vmatprep.mubr.f32.mxu0 0.0
        %753 = vmatmul.mubr.f32.gmra.mxu0 %v665
        %v754 = vpop.f32.mrf.mxu0
        %v755 = vadd.f32 0.0, %v754
        %v756 = vpop.f32.mrf.mxu0
        %757 = vmatprep.mubr.f32.mxu0 0.0
        %758 = vmatmul.mubr.f32.gmra.mxu0 %v668
        %v759 = vpop.f32.mrf.mxu0
        %v760 = vadd.f32 0.0, %v759
        %v761 = vpop.f32.mrf.mxu0
        %762 = vmatprep.mubr.f32.mxu0 0.0
        %763 = vmatmul.mubr.f32.gmra.mxu0 %v671
        %v764 = vpop.f32.mrf.mxu0
        %v765 = vadd.f32 0.0, %v764
        %v766 = vpop.f32.mrf.mxu0
        %767 = vmatprep.mubr.f32.mxu0 0.0
        %768 = vmatmul.mubr.f32.gmra.mxu0 %v674
        %v769 = vpop.f32.mrf.mxu0
        %v770 = vadd.f32 0.0, %v769
        %v771 = vpop.f32.mrf.mxu0
        %772 = vmatprep.mubr.f32.mxu0 0.0
        %773 = vmatmul.mubr.f32.gmra.mxu0 %v677
        %v774 = vpop.f32.mrf.mxu0
        %v775 = vadd.f32 0.0, %v774
        %v776 = vpop.f32.mrf.mxu0
        %777 = vmatprep.mubr.f32.mxu0 0.0
        %778 = vmatmul.mubr.f32.gmra.mxu0 %v680
        %v779 = vpop.f32.mrf.mxu0
        %v780 = vadd.f32 0.0, %v779
        %v781 = vpop.f32.mrf.mxu0
        %782 = vmatprep.mubr.f32.mxu0 0.0
        %783 = vmatmul.mubr.f32.gmra.mxu0 %v683
        %v784 = vpop.f32.mrf.mxu0
        %v785 = vadd.f32 0.0, %v784
        %v786 = vpop.f32.mrf.mxu0
        %787 = vmatprep.mubr.f32.mxu0 0.0
        %788 = vmatmul.mubr.f32.gmra.mxu0 %v686
        %v789 = vpop.f32.mrf.mxu0
        %v790 = vadd.f32 0.0, %v789
        %v791 = vpop.f32.mrf.mxu0
        %792 = vdwg.mxu0
        %v793 = vmax.f32 %v755, %v775
        %v794 = vmax.f32 %v760, %v780
        %v795 = vmax.f32 %v765, %v785
        %v796 = vmax.f32 %v770, %v790
        %v797 = vmax.f32 %v793, %v794
        %v798 = vmax.f32 %v795, %v796
        %v799 = vmax.f32 %v797, %v798
        %v800 = vrot.slane %v799, 4
        %v801 = vmax.f32 %v799, %v800
        %v802 = vrot.slane %v801, 2
        %v803 = vmax.f32 %v801, %v802
        %v804 = vrot.slane %v803, 1
        %v805 = vmax.f32 %v803, %v804
        %v806 = vsub.f32 %v755, %v805
        %v807 = vsub.f32 %v760, %v805
        %v808 = vsub.f32 %v765, %v805
        %v809 = vsub.f32 %v770, %v805
        %v810 = vsub.f32 %v775, %v805
        %v811 = vsub.f32 %v780, %v805
        %v812 = vsub.f32 %v785, %v805
        %v813 = vsub.f32 %v790, %v805
        %v814 = vmul.f32 %v806, 1.442695
        %v815 = vpow.pop %v814
        %v816 = vmul.f32 %v807, 1.442695
        %v817 = vpow.pop %v816
        %v818 = vmul.f32 %v808, 1.442695
        %v819 = vpow.pop %v818
        %v820 = vmul.f32 %v809, 1.442695
        %v821 = vpow.pop %v820
        %v822 = vmul.f32 %v810, 1.442695
        %v823 = vpow.pop %v822
        %v824 = vmul.f32 %v811, 1.442695
        %v825 = vpow.pop %v824
        %v826 = vmul.f32 %v812, 1.442695
        %v827 = vpow.pop %v826
        %v828 = vmul.f32 %v813, 1.442695
        %v829 = vpow.pop %v828
        %v830 = vadd.f32 %v815, %v817
        %v831 = vadd.f32 %v830, %v819
        %v832 = vadd.f32 %v831, %v821
        %v833 = vadd.f32 %v832, %v823
        %v834 = vadd.f32 %v833, %v825
        %v835 = vadd.f32 %v834, %v827
        %v836 = vadd.f32 %v835, %v829
        %v837 = vrot.slane %v836, 4
        %v838 = vadd.f32 %v836, %v837
        %v839 = vrot.slane %v838, 2
        %v840 = vadd.f32 %v838, %v839
        %v841 = vrot.slane %v840, 1
        %v842 = vadd.f32 %v840, %v841
        %vm843 = vcmask 523264
        %v845 = vsel %vm843, %v613, 0
        %847 = vmatprep.subr.mxu0 0.0
        %848 = vmatpush1.msra.mxu0 0.0
        %849 = vmatprep.subr.mxu0 0.0
        %850 = vmatpush1.msra.mxu0 0.0
        %851 = vmatprep.subr.mxu0 0.0
        %852 = vmatpush1.msra.mxu0 0.0
        %853 = vmatprep.subr.mxu0 0.0
        %854 = vmatpush1.msra.mxu0 0.0
        %855 = vmatprep.subr.mxu0 0.0
        %856 = vmatpush1.msra.mxu0 0.0
        %857 = vmatprep.subr.mxu0 0.0
        %858 = vmatpush1.msra.mxu0 0.0
        %859 = vmatprep.subr.mxu0 0.0
        %860 = vmatpush1.msra.mxu0 0.0
        %861 = vmatprep.subr.mxu0 0.0
        %862 = vmatpush1.msra.mxu0 0.0
        %863 = vmatprep.subr.mxu0 0.0
        %864 = vmatpush1.msra.mxu0 %v829
        %865 = vmatprep.subr.mxu0 0.0
        %866 = vmatpush1.msra.mxu0 %v827
        %867 = vmatprep.subr.mxu0 0.0
        %868 = vmatpush1.msra.mxu0 %v825
        %869 = vmatprep.subr.mxu0 0.0
        %870 = vmatpush1.msra.mxu0 %v823
        %871 = vmatprep.subr.mxu0 0.0
        %872 = vmatpush1.msra.mxu0 %v821
        %873 = vmatprep.subr.mxu0 0.0
        %874 = vmatpush1.msra.mxu0 %v819
        %875 = vmatprep.subr.mxu0 0.0
        %876 = vmatpush1.msra.mxu0 %v817
        %877 = vmatprep.subr.mxu0 0.0
        %878 = vmatpush1.msra.mxu0 %v815
        %879 = vmatprep.subr.mxu0 0.0
        %880 = vmatpush2.msra.mxu0 0.0
        %881 = vmatprep.subr.mxu0 0.0
        %882 = vmatpush2.msra.mxu0 0.0
        %883 = vmatprep.subr.mxu0 0.0
        %884 = vmatpush2.msra.mxu0 0.0
        %885 = vmatprep.subr.mxu0 0.0
        %886 = vmatpush2.msra.mxu0 0.0
        %887 = vmatprep.subr.mxu0 0.0
        %888 = vmatpush2.msra.mxu0 0.0
        %889 = vmatprep.subr.mxu0 0.0
        %890 = vmatpush2.msra.mxu0 0.0
        %891 = vmatprep.subr.mxu0 0.0
        %892 = vmatpush2.msra.mxu0 0.0
        %893 = vmatprep.subr.mxu0 0.0
        %894 = vmatpush2.msra.mxu0 0.0
        %895 = vmatprep.subr.mxu0 0.0
        %896 = vmatpush2.msra.mxu0 0.0
        %897 = vmatprep.subr.mxu0 0.0
        %898 = vmatpush2.msra.mxu0 0.0
        %899 = vmatprep.subr.mxu0 0.0
        %900 = vmatpush2.msra.mxu0 0.0
        %901 = vmatprep.subr.mxu0 0.0
        %902 = vmatpush2.msra.mxu0 0.0
        %903 = vmatprep.subr.mxu0 0.0
        %904 = vmatpush2.msra.mxu0 0.0
        %905 = vmatprep.subr.mxu0 0.0
        %906 = vmatpush2.msra.mxu0 0.0
        %907 = vmatprep.subr.mxu0 0.0
        %908 = vmatpush2.msra.mxu0 0.0
        %909 = vmatprep.subr.mxu0 0.0
        %910 = vmatpush2.msra.mxu0 0.0
        %911 = vmatprep.mubr.f32.mxu0 0.0
        %912 = vmatmul.mubr.f32.gmra.mxu0 %v845
        %v913 = vpop.f32.mrf.mxu0
        %v914 = vadd.f32 0.0, %v913
        %v915 = vpop.f32.mrf.mxu0
        %916 = vdwg.mxu0
        %v917 = vrcp.pop %v842
        %v918 = vmul.f32 %v914, %v917
        %919 = vst [vmem:[#allocation2] sm:$0xff] %v918
        %920 = vxpose.xlu0.b32.start [1/16] %v529, 128
        %921 = vxpose.xlu0.b32.cont [2/16] 0.0, 128
        %922 = vxpose.xlu0.b32.cont [3/16] 0.0, 128
        %923 = vxpose.xlu0.b32.cont [4/16] 0.0, 128
        %924 = vxpose.xlu0.b32.cont [5/16] 0.0, 128
        %925 = vxpose.xlu0.b32.cont [6/16] 0.0, 128
        %926 = vxpose.xlu0.b32.cont [7/16] 0.0, 128
        %927 = vxpose.xlu0.b32.cont [8/16] 0.0, 128
        %928 = vxpose.xlu0.b32.cont [9/16] 0.0, 128
        %929 = vxpose.xlu0.b32.cont [10/16] 0.0, 128
        %930 = vxpose.xlu0.b32.cont [11/16] 0.0, 128
        %931 = vxpose.xlu0.b32.cont [12/16] 0.0, 128
        %932 = vxpose.xlu0.b32.cont [13/16] 0.0, 128
        %933 = vxpose.xlu0.b32.cont [14/16] 0.0, 128
        %934 = vxpose.xlu0.b32.cont [15/16] 0.0, 128
        %935 = vxpose.xlu0.b32.end [16/16] 0.0, 128
        %v936 = vpop.trf.xlu0
        %v937 = vpop.trf.xlu0
        %v938 = vpop.trf.xlu0
        %v939 = vpop.trf.xlu0
        %v940 = vpop.trf.xlu0
        %v941 = vpop.trf.xlu0
        %v942 = vpop.trf.xlu0
        %v943 = vpop.trf.xlu0
        %v944 = vpop.trf.xlu0
        %v945 = vpop.trf.xlu0
        %v946 = vpop.trf.xlu0
        %v947 = vpop.trf.xlu0
        %v948 = vpop.trf.xlu0
        %v949 = vpop.trf.xlu0
        %v950 = vpop.trf.xlu0
        %v951 = vpop.trf.xlu0
        %v953 = vsel %vm663, %v936, 0
        %v956 = vsel %vm663, %v937, 0
        %v959 = vsel %vm663, %v938, 0
        %v962 = vsel %vm663, %v939, 0
        %v965 = vsel %vm663, %v940, 0
        %v968 = vsel %vm663, %v941, 0
        %v971 = vsel %vm663, %v942, 0
        %v974 = vsel %vm663, %v943, 0
        %976 = vmatprep.subr.mxu0 0.0
        %977 = vmatpush1.msra.mxu0 0.0
        %978 = vmatprep.subr.mxu0 0.0
        %979 = vmatpush1.msra.mxu0 0.0
        %980 = vmatprep.subr.mxu0 0.0
        %981 = vmatpush1.msra.mxu0 0.0
        %982 = vmatprep.subr.mxu0 0.0
        %983 = vmatpush1.msra.mxu0 0.0
        %984 = vmatprep.subr.mxu0 0.0
        %985 = vmatpush1.msra.mxu0 0.0
        %986 = vmatprep.subr.mxu0 0.0
        %987 = vmatpush1.msra.mxu0 0.0
        %988 = vmatprep.subr.mxu0 0.0
        %989 = vmatpush1.msra.mxu0 0.0
        %990 = vmatprep.subr.mxu0 0.0
        %991 = vmatpush1.msra.mxu0 0.0
        %992 = vmatprep.subr.mxu0 0.0
        %993 = vmatpush1.msra.mxu0 0.0
        %994 = vmatprep.subr.mxu0 0.0
        %995 = vmatpush1.msra.mxu0 0.0
        %996 = vmatprep.subr.mxu0 0.0
        %997 = vmatpush1.msra.mxu0 0.0
        %998 = vmatprep.subr.mxu0 0.0
        %999 = vmatpush1.msra.mxu0 0.0
        %1000 = vmatprep.subr.mxu0 0.0
        %1001 = vmatpush1.msra.mxu0 0.0
        %1002 = vmatprep.subr.mxu0 0.0
        %1003 = vmatpush1.msra.mxu0 0.0
        %1004 = vmatprep.subr.mxu0 0.0
        %1005 = vmatpush1.msra.mxu0 0.0
        %1006 = vmatprep.subr.mxu0 0.0
        %1007 = vmatpush1.msra.mxu0 %v440
        %1008 = vmatprep.subr.mxu0 0.0
        %1009 = vmatpush2.msra.mxu0 0.0
        %1010 = vmatprep.subr.mxu0 0.0
        %1011 = vmatpush2.msra.mxu0 0.0
        %1012 = vmatprep.subr.mxu0 0.0
        %1013 = vmatpush2.msra.mxu0 0.0
        %1014 = vmatprep.subr.mxu0 0.0
        %1015 = vmatpush2.msra.mxu0 0.0
        %1016 = vmatprep.subr.mxu0 0.0
        %1017 = vmatpush2.msra.mxu0 0.0
        %1018 = vmatprep.subr.mxu0 0.0
        %1019 = vmatpush2.msra.mxu0 0.0
        %1020 = vmatprep.subr.mxu0 0.0
        %1021 = vmatpush2.msra.mxu0 0.0
        %1022 = vmatprep.subr.mxu0 0.0
        %1023 = vmatpush2.msra.mxu0 0.0
        %1024 = vmatprep.subr.mxu0 0.0
        %1025 = vmatpush2.msra.mxu0 0.0
        %1026 = vmatprep.subr.mxu0 0.0
        %1027 = vmatpush2.msra.mxu0 0.0
        %1028 = vmatprep.subr.mxu0 0.0
        %1029 = vmatpush2.msra.mxu0 0.0
        %1030 = vmatprep.subr.mxu0 0.0
        %1031 = vmatpush2.msra.mxu0 0.0
        %1032 = vmatprep.subr.mxu0 0.0
        %1033 = vmatpush2.msra.mxu0 0.0
        %1034 = vmatprep.subr.mxu0 0.0
        %1035 = vmatpush2.msra.mxu0 0.0
        %1036 = vmatprep.subr.mxu0 0.0
        %1037 = vmatpush2.msra.mxu0 0.0
        %1038 = vmatprep.subr.mxu0 0.0
        %1039 = vmatpush2.msra.mxu0 0.0
        %1040 = vmatprep.mubr.f32.mxu0 0.0
        %1041 = vmatmul.mubr.f32.gmra.mxu0 %v953
        %v1042 = vpop.f32.mrf.mxu0
        %v1043 = vadd.f32 0.0, %v1042
        %v1044 = vpop.f32.mrf.mxu0
        %1045 = vmatprep.mubr.f32.mxu0 0.0
        %1046 = vmatmul.mubr.f32.gmra.mxu0 %v956
        %v1047 = vpop.f32.mrf.mxu0
        %v1048 = vadd.f32 0.0, %v1047
        %v1049 = vpop.f32.mrf.mxu0
        %1050 = vmatprep.mubr.f32.mxu0 0.0
        %1051 = vmatmul.mubr.f32.gmra.mxu0 %v959
        %v1052 = vpop.f32.mrf.mxu0
        %v1053 = vadd.f32 0.0, %v1052
        %v1054 = vpop.f32.mrf.mxu0
        %1055 = vmatprep.mubr.f32.mxu0 0.0
        %1056 = vmatmul.mubr.f32.gmra.mxu0 %v962
        %v1057 = vpop.f32.mrf.mxu0
        %v1058 = vadd.f32 0.0, %v1057
        %v1059 = vpop.f32.mrf.mxu0
        %1060 = vmatprep.mubr.f32.mxu0 0.0
        %1061 = vmatmul.mubr.f32.gmra.mxu0 %v965
        %v1062 = vpop.f32.mrf.mxu0
        %v1063 = vadd.f32 0.0, %v1062
        %v1064 = vpop.f32.mrf.mxu0
        %1065 = vmatprep.mubr.f32.mxu0 0.0
        %1066 = vmatmul.mubr.f32.gmra.mxu0 %v968
        %v1067 = vpop.f32.mrf.mxu0
        %v1068 = vadd.f32 0.0, %v1067
        %v1069 = vpop.f32.mrf.mxu0
        %1070 = vmatprep.mubr.f32.mxu0 0.0
        %1071 = vmatmul.mubr.f32.gmra.mxu0 %v971
        %v1072 = vpop.f32.mrf.mxu0
        %v1073 = vadd.f32 0.0, %v1072
        %v1074 = vpop.f32.mrf.mxu0
        %1075 = vmatprep.mubr.f32.mxu0 0.0
        %1076 = vmatmul.mubr.f32.gmra.mxu0 %v974
        %v1077 = vpop.f32.mrf.mxu0
        %v1078 = vadd.f32 0.0, %v1077
        %v1079 = vpop.f32.mrf.mxu0
        %1080 = vdwg.mxu0
        %v1081 = vmax.f32 %v1043, %v1063
        %v1082 = vmax.f32 %v1048, %v1068
        %v1083 = vmax.f32 %v1053, %v1073
        %v1084 = vmax.f32 %v1058, %v1078
        %v1085 = vmax.f32 %v1081, %v1082
        %v1086 = vmax.f32 %v1083, %v1084
        %v1087 = vmax.f32 %v1085, %v1086
        %v1088 = vrot.slane %v1087, 4
        %v1089 = vmax.f32 %v1087, %v1088
        %v1090 = vrot.slane %v1089, 2
        %v1091 = vmax.f32 %v1089, %v1090
        %v1092 = vrot.slane %v1091, 1
        %v1093 = vmax.f32 %v1091, %v1092
        %v1094 = vsub.f32 %v1043, %v1093
        %v1095 = vsub.f32 %v1048, %v1093
        %v1096 = vsub.f32 %v1053, %v1093
        %v1097 = vsub.f32 %v1058, %v1093
        %v1098 = vsub.f32 %v1063, %v1093
        %v1099 = vsub.f32 %v1068, %v1093
        %v1100 = vsub.f32 %v1073, %v1093
        %v1101 = vsub.f32 %v1078, %v1093
        %v1102 = vmul.f32 %v1094, 1.442695
        %v1103 = vpow.pop %v1102
        %v1104 = vmul.f32 %v1095, 1.442695
        %v1105 = vpow.pop %v1104
        %v1106 = vmul.f32 %v1096, 1.442695
        %v1107 = vpow.pop %v1106
        %v1108 = vmul.f32 %v1097, 1.442695
        %v1109 = vpow.pop %v1108
        %v1110 = vmul.f32 %v1098, 1.442695
        %v1111 = vpow.pop %v1110
        %v1112 = vmul.f32 %v1099, 1.442695
        %v1113 = vpow.pop %v1112
        %v1114 = vmul.f32 %v1100, 1.442695
        %v1115 = vpow.pop %v1114
        %v1116 = vmul.f32 %v1101, 1.442695
        %v1117 = vpow.pop %v1116
        %v1118 = vadd.f32 %v1103, %v1105
        %v1119 = vadd.f32 %v1118, %v1107
        %v1120 = vadd.f32 %v1119, %v1109
        %v1121 = vadd.f32 %v1120, %v1111
        %v1122 = vadd.f32 %v1121, %v1113
        %v1123 = vadd.f32 %v1122, %v1115
        %v1124 = vadd.f32 %v1123, %v1117
        %v1125 = vrot.slane %v1124, 4
        %v1126 = vadd.f32 %v1124, %v1125
        %v1127 = vrot.slane %v1126, 2
        %v1128 = vadd.f32 %v1126, %v1127
        %v1129 = vrot.slane %v1128, 1
        %v1130 = vadd.f32 %v1128, %v1129
        %v1132 = vsel %vm843, %v618, 0
        %1134 = vmatprep.subr.mxu0 0.0
        %1135 = vmatpush1.msra.mxu0 0.0
        %1136 = vmatprep.subr.mxu0 0.0
        %1137 = vmatpush1.msra.mxu0 0.0
        %1138 = vmatprep.subr.mxu0 0.0
        %1139 = vmatpush1.msra.mxu0 0.0
        %1140 = vmatprep.subr.mxu0 0.0
        %1141 = vmatpush1.msra.mxu0 0.0
        %1142 = vmatprep.subr.mxu0 0.0
        %1143 = vmatpush1.msra.mxu0 0.0
        %1144 = vmatprep.subr.mxu0 0.0
        %1145 = vmatpush1.msra.mxu0 0.0
        %1146 = vmatprep.subr.mxu0 0.0
        %1147 = vmatpush1.msra.mxu0 0.0
        %1148 = vmatprep.subr.mxu0 0.0
        %1149 = vmatpush1.msra.mxu0 0.0
        %1150 = vmatprep.subr.mxu0 0.0
        %1151 = vmatpush1.msra.mxu0 %v1117
        %1152 = vmatprep.subr.mxu0 0.0
        %1153 = vmatpush1.msra.mxu0 %v1115
        %1154 = vmatprep.subr.mxu0 0.0
        %1155 = vmatpush1.msra.mxu0 %v1113
        %1156 = vmatprep.subr.mxu0 0.0
        %1157 = vmatpush1.msra.mxu0 %v1111
        %1158 = vmatprep.subr.mxu0 0.0
        %1159 = vmatpush1.msra.mxu0 %v1109
        %1160 = vmatprep.subr.mxu0 0.0
        %1161 = vmatpush1.msra.mxu0 %v1107
        %1162 = vmatprep.subr.mxu0 0.0
        %1163 = vmatpush1.msra.mxu0 %v1105
        %1164 = vmatprep.subr.mxu0 0.0
        %1165 = vmatpush1.msra.mxu0 %v1103
        %1166 = vmatprep.subr.mxu0 0.0
        %1167 = vmatpush2.msra.mxu0 0.0
        %1168 = vmatprep.subr.mxu0 0.0
        %1169 = vmatpush2.msra.mxu0 0.0
        %1170 = vmatprep.subr.mxu0 0.0
        %1171 = vmatpush2.msra.mxu0 0.0
        %1172 = vmatprep.subr.mxu0 0.0
        %1173 = vmatpush2.msra.mxu0 0.0
        %1174 = vmatprep.subr.mxu0 0.0
        %1175 = vmatpush2.msra.mxu0 0.0
        %1176 = vmatprep.subr.mxu0 0.0
        %1177 = vmatpush2.msra.mxu0 0.0
        %1178 = vmatprep.subr.mxu0 0.0
        %1179 = vmatpush2.msra.mxu0 0.0
        %1180 = vmatprep.subr.mxu0 0.0
        %1181 = vmatpush2.msra.mxu0 0.0
        %1182 = vmatprep.subr.mxu0 0.0
        %1183 = vmatpush2.msra.mxu0 0.0
        %1184 = vmatprep.subr.mxu0 0.0
        %1185 = vmatpush2.msra.mxu0 0.0
        %1186 = vmatprep.subr.mxu0 0.0
        %1187 = vmatpush2.msra.mxu0 0.0
        %1188 = vmatprep.subr.mxu0 0.0
        %1189 = vmatpush2.msra.mxu0 0.0
        %1190 = vmatprep.subr.mxu0 0.0
        %1191 = vmatpush2.msra.mxu0 0.0
        %1192 = vmatprep.subr.mxu0 0.0
        %1193 = vmatpush2.msra.mxu0 0.0
        %1194 = vmatprep.subr.mxu0 0.0
        %1195 = vmatpush2.msra.mxu0 0.0
        %1196 = vmatprep.subr.mxu0 0.0
        %1197 = vmatpush2.msra.mxu0 0.0
        %1198 = vmatprep.mubr.f32.mxu0 0.0
        %1199 = vmatmul.mubr.f32.gmra.mxu0 %v1132
        %v1200 = vpop.f32.mrf.mxu0
        %v1201 = vadd.f32 0.0, %v1200
        %v1202 = vpop.f32.mrf.mxu0
        %1203 = vdwg.mxu0
        %v1204 = vrcp.pop %v1130
        %v1205 = vmul.f32 %v1201, %v1204
        %1206 = vst [vmem:[#allocation2 + $0x8] sm:$0xff] %v1205
        %1207 = vxpose.xlu0.b32.start [1/16] %v534, 128
        %1208 = vxpose.xlu0.b32.cont [2/16] 0.0, 128
        %1209 = vxpose.xlu0.b32.cont [3/16] 0.0, 128
        %1210 = vxpose.xlu0.b32.cont [4/16] 0.0, 128
        %1211 = vxpose.xlu0.b32.cont [5/16] 0.0, 128
        %1212 = vxpose.xlu0.b32.cont [6/16] 0.0, 128
        %1213 = vxpose.xlu0.b32.cont [7/16] 0.0, 128
        %1214 = vxpose.xlu0.b32.cont [8/16] 0.0, 128
        %1215 = vxpose.xlu0.b32.cont [9/16] 0.0, 128
        %1216 = vxpose.xlu0.b32.cont [10/16] 0.0, 128
        %1217 = vxpose.xlu0.b32.cont [11/16] 0.0, 128
        %1218 = vxpose.xlu0.b32.cont [12/16] 0.0, 128
        %1219 = vxpose.xlu0.b32.cont [13/16] 0.0, 128
        %1220 = vxpose.xlu0.b32.cont [14/16] 0.0, 128
        %1221 = vxpose.xlu0.b32.cont [15/16] 0.0, 128
        %1222 = vxpose.xlu0.b32.end [16/16] 0.0, 128
        %v1223 = vpop.trf.xlu0
        %v1224 = vpop.trf.xlu0
        %v1225 = vpop.trf.xlu0
        %v1226 = vpop.trf.xlu0
        %v1227 = vpop.trf.xlu0
        %v1228 = vpop.trf.xlu0
        %v1229 = vpop.trf.xlu0
        %v1230 = vpop.trf.xlu0
        %v1231 = vpop.trf.xlu0
        %v1232 = vpop.trf.xlu0
        %v1233 = vpop.trf.xlu0
        %v1234 = vpop.trf.xlu0
        %v1235 = vpop.trf.xlu0
        %v1236 = vpop.trf.xlu0
        %v1237 = vpop.trf.xlu0
        %v1238 = vpop.trf.xlu0
        %v1240 = vsel %vm663, %v1223, 0
        %v1243 = vsel %vm663, %v1224, 0
        %v1246 = vsel %vm663, %v1225, 0
        %v1249 = vsel %vm663, %v1226, 0
        %v1252 = vsel %vm663, %v1227, 0
        %v1255 = vsel %vm663, %v1228, 0
        %v1258 = vsel %vm663, %v1229, 0
        %v1261 = vsel %vm663, %v1230, 0
        %1263 = vmatprep.subr.mxu0 0.0
        %1264 = vmatpush1.msra.mxu0 0.0
        %1265 = vmatprep.subr.mxu0 0.0
        %1266 = vmatpush1.msra.mxu0 0.0
        %1267 = vmatprep.subr.mxu0 0.0
        %1268 = vmatpush1.msra.mxu0 0.0
        %1269 = vmatprep.subr.mxu0 0.0
        %1270 = vmatpush1.msra.mxu0 0.0
        %1271 = vmatprep.subr.mxu0 0.0
        %1272 = vmatpush1.msra.mxu0 0.0
        %1273 = vmatprep.subr.mxu0 0.0
        %1274 = vmatpush1.msra.mxu0 0.0
        %1275 = vmatprep.subr.mxu0 0.0
        %1276 = vmatpush1.msra.mxu0 0.0
        %1277 = vmatprep.subr.mxu0 0.0
        %1278 = vmatpush1.msra.mxu0 0.0
        %1279 = vmatprep.subr.mxu0 0.0
        %1280 = vmatpush1.msra.mxu0 0.0
        %1281 = vmatprep.subr.mxu0 0.0
        %1282 = vmatpush1.msra.mxu0 0.0
        %1283 = vmatprep.subr.mxu0 0.0
        %1284 = vmatpush1.msra.mxu0 0.0
        %1285 = vmatprep.subr.mxu0 0.0
        %1286 = vmatpush1.msra.mxu0 0.0
        %1287 = vmatprep.subr.mxu0 0.0
        %1288 = vmatpush1.msra.mxu0 0.0
        %1289 = vmatprep.subr.mxu0 0.0
        %1290 = vmatpush1.msra.mxu0 0.0
        %1291 = vmatprep.subr.mxu0 0.0
        %1292 = vmatpush1.msra.mxu0 0.0
        %1293 = vmatprep.subr.mxu0 0.0
        %1294 = vmatpush1.msra.mxu0 %v445
        %1295 = vmatprep.subr.mxu0 0.0
        %1296 = vmatpush2.msra.mxu0 0.0
        %1297 = vmatprep.subr.mxu0 0.0
        %1298 = vmatpush2.msra.mxu0 0.0
        %1299 = vmatprep.subr.mxu0 0.0
        %1300 = vmatpush2.msra.mxu0 0.0
        %1301 = vmatprep.subr.mxu0 0.0
        %1302 = vmatpush2.msra.mxu0 0.0
        %1303 = vmatprep.subr.mxu0 0.0
        %1304 = vmatpush2.msra.mxu0 0.0
        %1305 = vmatprep.subr.mxu0 0.0
        %1306 = vmatpush2.msra.mxu0 0.0
        %1307 = vmatprep.subr.mxu0 0.0
        %1308 = vmatpush2.msra.mxu0 0.0
        %1309 = vmatprep.subr.mxu0 0.0
        %1310 = vmatpush2.msra.mxu0 0.0
        %1311 = vmatprep.subr.mxu0 0.0
        %1312 = vmatpush2.msra.mxu0 0.0
        %1313 = vmatprep.subr.mxu0 0.0
        %1314 = vmatpush2.msra.mxu0 0.0
        %1315 = vmatprep.subr.mxu0 0.0
        %1316 = vmatpush2.msra.mxu0 0.0
        %1317 = vmatprep.subr.mxu0 0.0
        %1318 = vmatpush2.msra.mxu0 0.0
        %1319 = vmatprep.subr.mxu0 0.0
        %1320 = vmatpush2.msra.mxu0 0.0
        %1321 = vmatprep.subr.mxu0 0.0
        %1322 = vmatpush2.msra.mxu0 0.0
        %1323 = vmatprep.subr.mxu0 0.0
        %1324 = vmatpush2.msra.mxu0 0.0
        %1325 = vmatprep.subr.mxu0 0.0
        %1326 = vmatpush2.msra.mxu0 0.0
        %1327 = vmatprep.mubr.f32.mxu0 0.0
        %1328 = vmatmul.mubr.f32.gmra.mxu0 %v1240
        %v1329 = vpop.f32.mrf.mxu0
        %v1330 = vadd.f32 0.0, %v1329
        %v1331 = vpop.f32.mrf.mxu0
        %1332 = vmatprep.mubr.f32.mxu0 0.0
        %1333 = vmatmul.mubr.f32.gmra.mxu0 %v1243
        %v1334 = vpop.f32.mrf.mxu0
        %v1335 = vadd.f32 0.0, %v1334
        %v1336 = vpop.f32.mrf.mxu0
        %1337 = vmatprep.mubr.f32.mxu0 0.0
        %1338 = vmatmul.mubr.f32.gmra.mxu0 %v1246
        %v1339 = vpop.f32.mrf.mxu0
        %v1340 = vadd.f32 0.0, %v1339
        %v1341 = vpop.f32.mrf.mxu0
        %1342 = vmatprep.mubr.f32.mxu0 0.0
        %1343 = vmatmul.mubr.f32.gmra.mxu0 %v1249
        %v1344 = vpop.f32.mrf.mxu0
        %v1345 = vadd.f32 0.0, %v1344
        %v1346 = vpop.f32.mrf.mxu0
        %1347 = vmatprep.mubr.f32.mxu0 0.0
        %1348 = vmatmul.mubr.f32.gmra.mxu0 %v1252
        %v1349 = vpop.f32.mrf.mxu0
        %v1350 = vadd.f32 0.0, %v1349
        %v1351 = vpop.f32.mrf.mxu0
        %1352 = vmatprep.mubr.f32.mxu0 0.0
        %1353 = vmatmul.mubr.f32.gmra.mxu0 %v1255
        %v1354 = vpop.f32.mrf.mxu0
        %v1355 = vadd.f32 0.0, %v1354
        %v1356 = vpop.f32.mrf.mxu0
        %1357 = vmatprep.mubr.f32.mxu0 0.0
        %1358 = vmatmul.mubr.f32.gmra.mxu0 %v1258
        %v1359 = vpop.f32.mrf.mxu0
        %v1360 = vadd.f32 0.0, %v1359
        %v1361 = vpop.f32.mrf.mxu0
        %1362 = vmatprep.mubr.f32.mxu0 0.0
        %1363 = vmatmul.mubr.f32.gmra.mxu0 %v1261
        %v1364 = vpop.f32.mrf.mxu0
        %v1365 = vadd.f32 0.0, %v1364
        %v1366 = vpop.f32.mrf.mxu0
        %1367 = vdwg.mxu0
        %v1368 = vmax.f32 %v1330, %v1350
        %v1369 = vmax.f32 %v1335, %v1355
        %v1370 = vmax.f32 %v1340, %v1360
        %v1371 = vmax.f32 %v1345, %v1365
        %v1372 = vmax.f32 %v1368, %v1369
        %v1373 = vmax.f32 %v1370, %v1371
        %v1374 = vmax.f32 %v1372, %v1373
        %v1375 = vrot.slane %v1374, 4
        %v1376 = vmax.f32 %v1374, %v1375
        %v1377 = vrot.slane %v1376, 2
        %v1378 = vmax.f32 %v1376, %v1377
        %v1379 = vrot.slane %v1378, 1
        %v1380 = vmax.f32 %v1378, %v1379
        %v1381 = vsub.f32 %v1330, %v1380
        %v1382 = vsub.f32 %v1335, %v1380
        %v1383 = vsub.f32 %v1340, %v1380
        %v1384 = vsub.f32 %v1345, %v1380
        %v1385 = vsub.f32 %v1350, %v1380
        %v1386 = vsub.f32 %v1355, %v1380
        %v1387 = vsub.f32 %v1360, %v1380
        %v1388 = vsub.f32 %v1365, %v1380
        %v1389 = vmul.f32 %v1381, 1.442695
        %v1390 = vpow.pop %v1389
        %v1391 = vmul.f32 %v1382, 1.442695
        %v1392 = vpow.pop %v1391
        %v1393 = vmul.f32 %v1383, 1.442695
        %v1394 = vpow.pop %v1393
        %v1395 = vmul.f32 %v1384, 1.442695
        %v1396 = vpow.pop %v1395
        %v1397 = vmul.f32 %v1385, 1.442695
        %v1398 = vpow.pop %v1397
        %v1399 = vmul.f32 %v1386, 1.442695
        %v1400 = vpow.pop %v1399
        %v1401 = vmul.f32 %v1387, 1.442695
        %v1402 = vpow.pop %v1401
        %v1403 = vmul.f32 %v1388, 1.442695
        %v1404 = vpow.pop %v1403
        %v1405 = vadd.f32 %v1390, %v1392
        %v1406 = vadd.f32 %v1405, %v1394
        %v1407 = vadd.f32 %v1406, %v1396
        %v1408 = vadd.f32 %v1407, %v1398
        %v1409 = vadd.f32 %v1408, %v1400
        %v1410 = vadd.f32 %v1409, %v1402
        %v1411 = vadd.f32 %v1410, %v1404
        %v1412 = vrot.slane %v1411, 4
        %v1413 = vadd.f32 %v1411, %v1412
        %v1414 = vrot.slane %v1413, 2
        %v1415 = vadd.f32 %v1413, %v1414
        %v1416 = vrot.slane %v1415, 1
        %v1417 = vadd.f32 %v1415, %v1416
        %v1419 = vsel %vm843, %v623, 0
        %1421 = vmatprep.subr.mxu0 0.0
        %1422 = vmatpush1.msra.mxu0 0.0
        %1423 = vmatprep.subr.mxu0 0.0
        %1424 = vmatpush1.msra.mxu0 0.0
        %1425 = vmatprep.subr.mxu0 0.0
        %1426 = vmatpush1.msra.mxu0 0.0
        %1427 = vmatprep.subr.mxu0 0.0
        %1428 = vmatpush1.msra.mxu0 0.0
        %1429 = vmatprep.subr.mxu0 0.0
        %1430 = vmatpush1.msra.mxu0 0.0
        %1431 = vmatprep.subr.mxu0 0.0
        %1432 = vmatpush1.msra.mxu0 0.0
        %1433 = vmatprep.subr.mxu0 0.0
        %1434 = vmatpush1.msra.mxu0 0.0
        %1435 = vmatprep.subr.mxu0 0.0
        %1436 = vmatpush1.msra.mxu0 0.0
        %1437 = vmatprep.subr.mxu0 0.0
        %1438 = vmatpush1.msra.mxu0 %v1404
        %1439 = vmatprep.subr.mxu0 0.0
        %1440 = vmatpush1.msra.mxu0 %v1402
        %1441 = vmatprep.subr.mxu0 0.0
        %1442 = vmatpush1.msra.mxu0 %v1400
        %1443 = vmatprep.subr.mxu0 0.0
        %1444 = vmatpush1.msra.mxu0 %v1398
        %1445 = vmatprep.subr.mxu0 0.0
        %1446 = vmatpush1.msra.mxu0 %v1396
        %1447 = vmatprep.subr.mxu0 0.0
        %1448 = vmatpush1.msra.mxu0 %v1394
        %1449 = vmatprep.subr.mxu0 0.0
        %1450 = vmatpush1.msra.mxu0 %v1392
        %1451 = vmatprep.subr.mxu0 0.0
        %1452 = vmatpush1.msra.mxu0 %v1390
        %1453 = vmatprep.subr.mxu0 0.0
        %1454 = vmatpush2.msra.mxu0 0.0
        %1455 = vmatprep.subr.mxu0 0.0
        %1456 = vmatpush2.msra.mxu0 0.0
        %1457 = vmatprep.subr.mxu0 0.0
        %1458 = vmatpush2.msra.mxu0 0.0
        %1459 = vmatprep.subr.mxu0 0.0
        %1460 = vmatpush2.msra.mxu0 0.0
        %1461 = vmatprep.subr.mxu0 0.0
        %1462 = vmatpush2.msra.mxu0 0.0
        %1463 = vmatprep.subr.mxu0 0.0
        %1464 = vmatpush2.msra.mxu0 0.0
        %1465 = vmatprep.subr.mxu0 0.0
        %1466 = vmatpush2.msra.mxu0 0.0
        %1467 = vmatprep.subr.mxu0 0.0
        %1468 = vmatpush2.msra.mxu0 0.0
        %1469 = vmatprep.subr.mxu0 0.0
        %1470 = vmatpush2.msra.mxu0 0.0
        %1471 = vmatprep.subr.mxu0 0.0
        %1472 = vmatpush2.msra.mxu0 0.0
        %1473 = vmatprep.subr.mxu0 0.0
        %1474 = vmatpush2.msra.mxu0 0.0
        %1475 = vmatprep.subr.mxu0 0.0
        %1476 = vmatpush2.msra.mxu0 0.0
        %1477 = vmatprep.subr.mxu0 0.0
        %1478 = vmatpush2.msra.mxu0 0.0
        %1479 = vmatprep.subr.mxu0 0.0
        %1480 = vmatpush2.msra.mxu0 0.0
        %1481 = vmatprep.subr.mxu0 0.0
        %1482 = vmatpush2.msra.mxu0 0.0
        %1483 = vmatprep.subr.mxu0 0.0
        %1484 = vmatpush2.msra.mxu0 0.0
        %1485 = vmatprep.mubr.f32.mxu0 0.0
        %1486 = vmatmul.mubr.f32.gmra.mxu0 %v1419
        %v1487 = vpop.f32.mrf.mxu0
        %v1488 = vadd.f32 0.0, %v1487
        %v1489 = vpop.f32.mrf.mxu0
        %1490 = vdwg.mxu0
        %v1491 = vrcp.pop %v1417
        %v1492 = vmul.f32 %v1488, %v1491
        %1493 = vst [vmem:[#allocation2 + $0x10] sm:$0xff] %v1492
        %1494 = vxpose.xlu0.b32.start [1/16] %v539, 128
        %1495 = vxpose.xlu0.b32.cont [2/16] 0.0, 128
        %1496 = vxpose.xlu0.b32.cont [3/16] 0.0, 128
        %1497 = vxpose.xlu0.b32.cont [4/16] 0.0, 128
        %1498 = vxpose.xlu0.b32.cont [5/16] 0.0, 128
        %1499 = vxpose.xlu0.b32.cont [6/16] 0.0, 128
        %1500 = vxpose.xlu0.b32.cont [7/16] 0.0, 128
        %1501 = vxpose.xlu0.b32.cont [8/16] 0.0, 128
        %1502 = vxpose.xlu0.b32.cont [9/16] 0.0, 128
        %1503 = vxpose.xlu0.b32.cont [10/16] 0.0, 128
        %1504 = vxpose.xlu0.b32.cont [11/16] 0.0, 128
        %1505 = vxpose.xlu0.b32.cont [12/16] 0.0, 128
        %1506 = vxpose.xlu0.b32.cont [13/16] 0.0, 128
        %1507 = vxpose.xlu0.b32.cont [14/16] 0.0, 128
        %1508 = vxpose.xlu0.b32.cont [15/16] 0.0, 128
        %1509 = vxpose.xlu0.b32.end [16/16] 0.0, 128
        %v1510 = vpop.trf.xlu0
        %v1511 = vpop.trf.xlu0
        %v1512 = vpop.trf.xlu0
        %v1513 = vpop.trf.xlu0
        %v1514 = vpop.trf.xlu0
        %v1515 = vpop.trf.xlu0
        %v1516 = vpop.trf.xlu0
        %v1517 = vpop.trf.xlu0
        %v1518 = vpop.trf.xlu0
        %v1519 = vpop.trf.xlu0
        %v1520 = vpop.trf.xlu0
        %v1521 = vpop.trf.xlu0
        %v1522 = vpop.trf.xlu0
        %v1523 = vpop.trf.xlu0
        %v1524 = vpop.trf.xlu0
        %v1525 = vpop.trf.xlu0
        %v1527 = vsel %vm663, %v1510, 0
        %v1530 = vsel %vm663, %v1511, 0
        %v1533 = vsel %vm663, %v1512, 0
        %v1536 = vsel %vm663, %v1513, 0
        %v1539 = vsel %vm663, %v1514, 0
        %v1542 = vsel %vm663, %v1515, 0
        %v1545 = vsel %vm663, %v1516, 0
        %v1548 = vsel %vm663, %v1517, 0
        %1550 = vmatprep.subr.mxu0 0.0
        %1551 = vmatpush1.msra.mxu0 0.0
        %1552 = vmatprep.subr.mxu0 0.0
        %1553 = vmatpush1.msra.mxu0 0.0
        %1554 = vmatprep.subr.mxu0 0.0
        %1555 = vmatpush1.msra.mxu0 0.0
        %1556 = vmatprep.subr.mxu0 0.0
        %1557 = vmatpush1.msra.mxu0 0.0
        %1558 = vmatprep.subr.mxu0 0.0
        %1559 = vmatpush1.msra.mxu0 0.0
        %1560 = vmatprep.subr.mxu0 0.0
        %1561 = vmatpush1.msra.mxu0 0.0
        %1562 = vmatprep.subr.mxu0 0.0
        %1563 = vmatpush1.msra.mxu0 0.0
        %1564 = vmatprep.subr.mxu0 0.0
        %1565 = vmatpush1.msra.mxu0 0.0
        %1566 = vmatprep.subr.mxu0 0.0
        %1567 = vmatpush1.msra.mxu0 0.0
        %1568 = vmatprep.subr.mxu0 0.0
        %1569 = vmatpush1.msra.mxu0 0.0
        %1570 = vmatprep.subr.mxu0 0.0
        %1571 = vmatpush1.msra.mxu0 0.0
        %1572 = vmatprep.subr.mxu0 0.0
        %1573 = vmatpush1.msra.mxu0 0.0
        %1574 = vmatprep.subr.mxu0 0.0
        %1575 = vmatpush1.msra.mxu0 0.0
        %1576 = vmatprep.subr.mxu0 0.0
        %1577 = vmatpush1.msra.mxu0 0.0
        %1578 = vmatprep.subr.mxu0 0.0
        %1579 = vmatpush1.msra.mxu0 0.0
        %1580 = vmatprep.subr.mxu0 0.0
        %1581 = vmatpush1.msra.mxu0 %v450
        %1582 = vmatprep.subr.mxu0 0.0
        %1583 = vmatpush2.msra.mxu0 0.0
        %1584 = vmatprep.subr.mxu0 0.0
        %1585 = vmatpush2.msra.mxu0 0.0
        %1586 = vmatprep.subr.mxu0 0.0
        %1587 = vmatpush2.msra.mxu0 0.0
        %1588 = vmatprep.subr.mxu0 0.0
        %1589 = vmatpush2.msra.mxu0 0.0
        %1590 = vmatprep.subr.mxu0 0.0
        %1591 = vmatpush2.msra.mxu0 0.0
        %1592 = vmatprep.subr.mxu0 0.0
        %1593 = vmatpush2.msra.mxu0 0.0
        %1594 = vmatprep.subr.mxu0 0.0
        %1595 = vmatpush2.msra.mxu0 0.0
        %1596 = vmatprep.subr.mxu0 0.0
        %1597 = vmatpush2.msra.mxu0 0.0
        %1598 = vmatprep.subr.mxu0 0.0
        %1599 = vmatpush2.msra.mxu0 0.0
        %1600 = vmatprep.subr.mxu0 0.0
        %1601 = vmatpush2.msra.mxu0 0.0
        %1602 = vmatprep.subr.mxu0 0.0
        %1603 = vmatpush2.msra.mxu0 0.0
        %1604 = vmatprep.subr.mxu0 0.0
        %1605 = vmatpush2.msra.mxu0 0.0
        %1606 = vmatprep.subr.mxu0 0.0
        %1607 = vmatpush2.msra.mxu0 0.0
        %1608 = vmatprep.subr.mxu0 0.0
        %1609 = vmatpush2.msra.mxu0 0.0
        %1610 = vmatprep.subr.mxu0 0.0
        %1611 = vmatpush2.msra.mxu0 0.0
        %1612 = vmatprep.subr.mxu0 0.0
        %1613 = vmatpush2.msra.mxu0 0.0
        %1614 = vmatprep.mubr.f32.mxu0 0.0
        %1615 = vmatmul.mubr.f32.gmra.mxu0 %v1527
        %v1616 = vpop.f32.mrf.mxu0
        %v1617 = vadd.f32 0.0, %v1616
        %v1618 = vpop.f32.mrf.mxu0
        %1619 = vmatprep.mubr.f32.mxu0 0.0
        %1620 = vmatmul.mubr.f32.gmra.mxu0 %v1530
        %v1621 = vpop.f32.mrf.mxu0
        %v1622 = vadd.f32 0.0, %v1621
        %v1623 = vpop.f32.mrf.mxu0
        %1624 = vmatprep.mubr.f32.mxu0 0.0
        %1625 = vmatmul.mubr.f32.gmra.mxu0 %v1533
        %v1626 = vpop.f32.mrf.mxu0
        %v1627 = vadd.f32 0.0, %v1626
        %v1628 = vpop.f32.mrf.mxu0
        %1629 = vmatprep.mubr.f32.mxu0 0.0
        %1630 = vmatmul.mubr.f32.gmra.mxu0 %v1536
        %v1631 = vpop.f32.mrf.mxu0
        %v1632 = vadd.f32 0.0, %v1631
        %v1633 = vpop.f32.mrf.mxu0
        %1634 = vmatprep.mubr.f32.mxu0 0.0
        %1635 = vmatmul.mubr.f32.gmra.mxu0 %v1539
        %v1636 = vpop.f32.mrf.mxu0
        %v1637 = vadd.f32 0.0, %v1636
        %v1638 = vpop.f32.mrf.mxu0
        %1639 = vmatprep.mubr.f32.mxu0 0.0
        %1640 = vmatmul.mubr.f32.gmra.mxu0 %v1542
        %v1641 = vpop.f32.mrf.mxu0
        %v1642 = vadd.f32 0.0, %v1641
        %v1643 = vpop.f32.mrf.mxu0
        %1644 = vmatprep.mubr.f32.mxu0 0.0
        %1645 = vmatmul.mubr.f32.gmra.mxu0 %v1545
        %v1646 = vpop.f32.mrf.mxu0
        %v1647 = vadd.f32 0.0, %v1646
        %v1648 = vpop.f32.mrf.mxu0
        %1649 = vmatprep.mubr.f32.mxu0 0.0
        %1650 = vmatmul.mubr.f32.gmra.mxu0 %v1548
        %v1651 = vpop.f32.mrf.mxu0
        %v1652 = vadd.f32 0.0, %v1651
        %v1653 = vpop.f32.mrf.mxu0
        %1654 = vdwg.mxu0
        %v1655 = vmax.f32 %v1617, %v1637
        %v1656 = vmax.f32 %v1622, %v1642
        %v1657 = vmax.f32 %v1627, %v1647
        %v1658 = vmax.f32 %v1632, %v1652
        %v1659 = vmax.f32 %v1655, %v1656
        %v1660 = vmax.f32 %v1657, %v1658
        %v1661 = vmax.f32 %v1659, %v1660
        %v1662 = vrot.slane %v1661, 4
        %v1663 = vmax.f32 %v1661, %v1662
        %v1664 = vrot.slane %v1663, 2
        %v1665 = vmax.f32 %v1663, %v1664
        %v1666 = vrot.slane %v1665, 1
        %v1667 = vmax.f32 %v1665, %v1666
        %v1668 = vsub.f32 %v1617, %v1667
        %v1669 = vsub.f32 %v1622, %v1667
        %v1670 = vsub.f32 %v1627, %v1667
        %v1671 = vsub.f32 %v1632, %v1667
        %v1672 = vsub.f32 %v1637, %v1667
        %v1673 = vsub.f32 %v1642, %v1667
        %v1674 = vsub.f32 %v1647, %v1667
        %v1675 = vsub.f32 %v1652, %v1667
        %v1676 = vmul.f32 %v1668, 1.442695
        %v1677 = vpow.pop %v1676
        %v1678 = vmul.f32 %v1669, 1.442695
        %v1679 = vpow.pop %v1678
        %v1680 = vmul.f32 %v1670, 1.442695
        %v1681 = vpow.pop %v1680
        %v1682 = vmul.f32 %v1671, 1.442695
        %v1683 = vpow.pop %v1682
        %v1684 = vmul.f32 %v1672, 1.442695
        %v1685 = vpow.pop %v1684
        %v1686 = vmul.f32 %v1673, 1.442695
        %v1687 = vpow.pop %v1686
        %v1688 = vmul.f32 %v1674, 1.442695
        %v1689 = vpow.pop %v1688
        %v1690 = vmul.f32 %v1675, 1.442695
        %v1691 = vpow.pop %v1690
        %v1692 = vadd.f32 %v1677, %v1679
        %v1693 = vadd.f32 %v1692, %v1681
        %v1694 = vadd.f32 %v1693, %v1683
        %v1695 = vadd.f32 %v1694, %v1685
        %v1696 = vadd.f32 %v1695, %v1687
        %v1697 = vadd.f32 %v1696, %v1689
        %v1698 = vadd.f32 %v1697, %v1691
        %v1699 = vrot.slane %v1698, 4
        %v1700 = vadd.f32 %v1698, %v1699
        %v1701 = vrot.slane %v1700, 2
        %v1702 = vadd.f32 %v1700, %v1701
        %v1703 = vrot.slane %v1702, 1
        %v1704 = vadd.f32 %v1702, %v1703
        %v1706 = vsel %vm843, %v628, 0
        %1708 = vmatprep.subr.mxu0 0.0
        %1709 = vmatpush1.msra.mxu0 0.0
        %1710 = vmatprep.subr.mxu0 0.0
        %1711 = vmatpush1.msra.mxu0 0.0
        %1712 = vmatprep.subr.mxu0 0.0
        %1713 = vmatpush1.msra.mxu0 0.0
        %1714 = vmatprep.subr.mxu0 0.0
        %1715 = vmatpush1.msra.mxu0 0.0
        %1716 = vmatprep.subr.mxu0 0.0
        %1717 = vmatpush1.msra.mxu0 0.0
        %1718 = vmatprep.subr.mxu0 0.0
        %1719 = vmatpush1.msra.mxu0 0.0
        %1720 = vmatprep.subr.mxu0 0.0
        %1721 = vmatpush1.msra.mxu0 0.0
        %1722 = vmatprep.subr.mxu0 0.0
        %1723 = vmatpush1.msra.mxu0 0.0
        %1724 = vmatprep.subr.mxu0 0.0
        %1725 = vmatpush1.msra.mxu0 %v1691
        %1726 = vmatprep.subr.mxu0 0.0
        %1727 = vmatpush1.msra.mxu0 %v1689
        %1728 = vmatprep.subr.mxu0 0.0
        %1729 = vmatpush1.msra.mxu0 %v1687
        %1730 = vmatprep.subr.mxu0 0.0
        %1731 = vmatpush1.msra.mxu0 %v1685
        %1732 = vmatprep.subr.mxu0 0.0
        %1733 = vmatpush1.msra.mxu0 %v1683
        %1734 = vmatprep.subr.mxu0 0.0
        %1735 = vmatpush1.msra.mxu0 %v1681
        %1736 = vmatprep.subr.mxu0 0.0
        %1737 = vmatpush1.msra.mxu0 %v1679
        %1738 = vmatprep.subr.mxu0 0.0
        %1739 = vmatpush1.msra.mxu0 %v1677
        %1740 = vmatprep.subr.mxu0 0.0
        %1741 = vmatpush2.msra.mxu0 0.0
        %1742 = vmatprep.subr.mxu0 0.0
        %1743 = vmatpush2.msra.mxu0 0.0
        %1744 = vmatprep.subr.mxu0 0.0
        %1745 = vmatpush2.msra.mxu0 0.0
        %1746 = vmatprep.subr.mxu0 0.0
        %1747 = vmatpush2.msra.mxu0 0.0
        %1748 = vmatprep.subr.mxu0 0.0
        %1749 = vmatpush2.msra.mxu0 0.0
        %1750 = vmatprep.subr.mxu0 0.0
        %1751 = vmatpush2.msra.mxu0 0.0
        %1752 = vmatprep.subr.mxu0 0.0
        %1753 = vmatpush2.msra.mxu0 0.0
        %1754 = vmatprep.subr.mxu0 0.0
        %1755 = vmatpush2.msra.mxu0 0.0
        %1756 = vmatprep.subr.mxu0 0.0
        %1757 = vmatpush2.msra.mxu0 0.0
        %1758 = vmatprep.subr.mxu0 0.0
        %1759 = vmatpush2.msra.mxu0 0.0
        %1760 = vmatprep.subr.mxu0 0.0
        %1761 = vmatpush2.msra.mxu0 0.0
        %1762 = vmatprep.subr.mxu0 0.0
        %1763 = vmatpush2.msra.mxu0 0.0
        %1764 = vmatprep.subr.mxu0 0.0
        %1765 = vmatpush2.msra.mxu0 0.0
        %1766 = vmatprep.subr.mxu0 0.0
        %1767 = vmatpush2.msra.mxu0 0.0
        %1768 = vmatprep.subr.mxu0 0.0
        %1769 = vmatpush2.msra.mxu0 0.0
        %1770 = vmatprep.subr.mxu0 0.0
        %1771 = vmatpush2.msra.mxu0 0.0
        %1772 = vmatprep.mubr.f32.mxu0 0.0
        %1773 = vmatmul.mubr.f32.gmra.mxu0 %v1706
        %v1774 = vpop.f32.mrf.mxu0
        %v1775 = vadd.f32 0.0, %v1774
        %v1776 = vpop.f32.mrf.mxu0
        %1777 = vdwg.mxu0
        %v1778 = vrcp.pop %v1704
        %v1779 = vmul.f32 %v1775, %v1778
        %1780 = vst [vmem:[#allocation2 + $0x18] sm:$0xff] %v1779
        %v1781 = vld [vmem:[%s5] sm:$0xff]
        %v1782 = vld [vmem:[%s5 + $0x8] sm:$0xff]
        %v1783 = vld [vmem:[%s5 + $0x10] sm:$0xff]
        %v1784 = vld [vmem:[%s5 + $0x18] sm:$0xff]
        %v1785 = vld [vmem:[#allocation2] sm:$0xff]
        %v1786 = vld [vmem:[#allocation2 + $0x8] sm:$0xff]
        %v1787 = vld [vmem:[#allocation2 + $0x10] sm:$0xff]
        %v1788 = vld [vmem:[#allocation2 + $0x18] sm:$0xff]
        %v1790 = vsel %vm355, %v1781, 0
        %v1793 = vsel %vm355, %v1782, 0
        %v1796 = vsel %vm355, %v1783, 0
        %v1799 = vsel %vm355, %v1784, 0
        %1801 = vmatprep.subr.mxu0 0.0
        %1802 = vmatpush1.msra.mxu0 0.0
        %1803 = vmatprep.subr.mxu0 0.0
        %1804 = vmatpush1.msra.mxu0 0.0
        %1805 = vmatprep.subr.mxu0 0.0
        %1806 = vmatpush1.msra.mxu0 0.0
        %1807 = vmatprep.subr.mxu0 0.0
        %1808 = vmatpush1.msra.mxu0 0.0
        %1809 = vmatprep.subr.mxu0 0.0
        %1810 = vmatpush1.msra.mxu0 0.0
        %1811 = vmatprep.subr.mxu0 0.0
        %1812 = vmatpush1.msra.mxu0 0.0
        %1813 = vmatprep.subr.mxu0 0.0
        %1814 = vmatpush1.msra.mxu0 0.0
        %1815 = vmatprep.subr.mxu0 0.0
        %1816 = vmatpush1.msra.mxu0 0.0
        %1817 = vmatprep.subr.mxu0 0.0
        %1818 = vmatpush1.msra.mxu0 0.0
        %1819 = vmatprep.subr.mxu0 0.0
        %1820 = vmatpush1.msra.mxu0 0.0
        %1821 = vmatprep.subr.mxu0 0.0
        %1822 = vmatpush1.msra.mxu0 0.0
        %1823 = vmatprep.subr.mxu0 0.0
        %1824 = vmatpush1.msra.mxu0 0.0
        %1825 = vmatprep.subr.mxu0 0.0
        %1826 = vmatpush1.msra.mxu0 %v1788
        %1827 = vmatprep.subr.mxu0 0.0
        %1828 = vmatpush1.msra.mxu0 %v1787
        %1829 = vmatprep.subr.mxu0 0.0
        %1830 = vmatpush1.msra.mxu0 %v1786
        %1831 = vmatprep.subr.mxu0 0.0
        %1832 = vmatpush1.msra.mxu0 %v1785
        %1833 = vmatprep.subr.mxu0 0.0
        %1834 = vmatpush2.msra.mxu0 0.0
        %1835 = vmatprep.subr.mxu0 0.0
        %1836 = vmatpush2.msra.mxu0 0.0
        %1837 = vmatprep.subr.mxu0 0.0
        %1838 = vmatpush2.msra.mxu0 0.0
        %1839 = vmatprep.subr.mxu0 0.0
        %1840 = vmatpush2.msra.mxu0 0.0
        %1841 = vmatprep.subr.mxu0 0.0
        %1842 = vmatpush2.msra.mxu0 0.0
        %1843 = vmatprep.subr.mxu0 0.0
        %1844 = vmatpush2.msra.mxu0 0.0
        %1845 = vmatprep.subr.mxu0 0.0
        %1846 = vmatpush2.msra.mxu0 0.0
        %1847 = vmatprep.subr.mxu0 0.0
        %1848 = vmatpush2.msra.mxu0 0.0
        %1849 = vmatprep.subr.mxu0 0.0
        %1850 = vmatpush2.msra.mxu0 0.0
        %1851 = vmatprep.subr.mxu0 0.0
        %1852 = vmatpush2.msra.mxu0 0.0
        %1853 = vmatprep.subr.mxu0 0.0
        %1854 = vmatpush2.msra.mxu0 0.0
        %1855 = vmatprep.subr.mxu0 0.0
        %1856 = vmatpush2.msra.mxu0 0.0
        %1857 = vmatprep.subr.mxu0 0.0
        %1858 = vmatpush2.msra.mxu0 0.0
        %1859 = vmatprep.subr.mxu0 0.0
        %1860 = vmatpush2.msra.mxu0 0.0
        %1861 = vmatprep.subr.mxu0 0.0
        %1862 = vmatpush2.msra.mxu0 0.0
        %1863 = vmatprep.subr.mxu0 0.0
        %1864 = vmatpush2.msra.mxu0 0.0
        %1865 = vmatprep.mubr.f32.mxu0 0.0
        %1866 = vmatmul.mubr.f32.gmra.mxu0 %v1790
        %v1867 = vpop.f32.mrf.mxu0
        %v1868 = vadd.f32 0.0, %v1867
        %v1869 = vpop.f32.mrf.mxu0
        %1870 = vmatprep.mubr.f32.mxu0 0.0
        %1871 = vmatmul.mubr.f32.gmra.mxu0 %v1793
        %v1872 = vpop.f32.mrf.mxu0
        %v1873 = vadd.f32 0.0, %v1872
        %v1874 = vpop.f32.mrf.mxu0
        %1875 = vmatprep.mubr.f32.mxu0 0.0
        %1876 = vmatmul.mubr.f32.gmra.mxu0 %v1796
        %v1877 = vpop.f32.mrf.mxu0
        %v1878 = vadd.f32 0.0, %v1877
        %v1879 = vpop.f32.mrf.mxu0
        %1880 = vmatprep.mubr.f32.mxu0 0.0
        %1881 = vmatmul.mubr.f32.gmra.mxu0 %v1799
        %v1882 = vpop.f32.mrf.mxu0
        %v1883 = vadd.f32 0.0, %v1882
        %v1884 = vpop.f32.mrf.mxu0
        %1885 = vdwg.mxu0
        %1886 = vst [vmem:[%s325] sm:$0xff] %v1868
        %1887 = vst [vmem:[%s325 + $0x8] sm:$0xff] %v1873
        %1888 = vst [vmem:[%s325 + $0x10] sm:$0xff] %v1878
        %1889 = vst [vmem:[%s325 + $0x18] sm:$0xff] %v1883
        %s1890 = sand.u32 %s177, 1
        %s1891 = sand.u32 %s177, 1
        %s1892 = smul.addr %s1891, 32
        %s1893 = scalar_lea.vmem [#allocation4], %s1892
        // Predicated region
        $region83: #{efficient_self_attention.1} parent=77 // pred_check
          %p1894 = pneg %p187
        $region84: #{efficient_self_attention.1} parent=77 // pred_check_branch
          %1896 = sbr.rel (%p1894) target = $region86
        $region85: #{efficient_self_attention.1} parent=77 // pred_region
          %s1897 = smul.addr %s21, 8
          %s1898 = sadd.s32 %s22, %s1897
          %s1899 = smul.addr %s1898, 8
          %s1900 = scalar_lea.vmem %s6, %s1899
          // Predicated region
          $region87: #{efficient_self_attention.1} parent=85 // pred_check
            _
          $region88: #{efficient_self_attention.1} parent=85 // pred_check_branch
            %1902 = sbr.rel (0) target = $region90
          $region89: #{efficient_self_attention.1} parent=85 // pred_region
            // Predicated region
            $region91: #{efficient_self_attention.1} parent=89 // pred_check
              _
            $region92: #{efficient_self_attention.1} parent=89 // pred_check_branch
              %1904 = sbr.rel (0) target = $region94
            $region93: #{efficient_self_attention.1} parent=89 // pred_region
              // Predicated region
              $region106: #{efficient_self_attention.1} parent=93 // pred_check
                _
              $region107: #{efficient_self_attention.1} parent=93 // pred_check_branch
                %1926 = sbr.rel (0) target = $region109
              $region108: #{efficient_self_attention.1} parent=93 // pred_region
                loop: start=0, step=1, limit=1
                $region110: #{efficient_self_attention.1} parent=108 // loop_pre_header
                  _
                $region111: #{efficient_self_attention.1} parent=108 // loop_header
                  %s1928 = sphi 0, %s1932
                  %p1929 = scmp.ge.s32.totalorder %s1928, 1
                  %s1933 = sphi %s1893, %s1893
                  %s1934 = sphi %s1900, %s1900
                $region112: #{efficient_self_attention.1} parent=108 // loop_header_branch
                  %1931 = sbr.rel (%p1929) target = $region116
                $region113: #{efficient_self_attention.1} parent=108 // loop_body
                  %v1935 = vld [vmem:[%s1933] sm:$0xff]
                  %1936 = vst [vmem:[%s1934] sm:$0xff] %v1935
                  %v1937 = vld [vmem:[%s1933 + $0x8] sm:$0xff]
                  %1938 = vst [vmem:[%s1934 + $0x10] sm:$0xff] %v1937
                  %v1939 = vld [vmem:[%s1933 + $0x10] sm:$0xff]
                  %1940 = vst [vmem:[%s1934 + $0x20] sm:$0xff] %v1939
                  %v1941 = vld [vmem:[%s1933 + $0x18] sm:$0xff]
                  %1942 = vst [vmem:[%s1934 + $0x30] sm:$0xff] %v1941
                $region114: #{efficient_self_attention.1} parent=108 // loop_footer
                  %s1932 = sadd.s32 1, %s1928
                $region115: #{efficient_self_attention.1} parent=108 // loop_footer_branch
                  %1927 = sbr.rel target = $region111
                $region116: #{efficient_self_attention.1} parent=108 // loop_exit
                  _
              $region109: #{efficient_self_attention.1} parent=93 // pred_fallthru
                _
              // Predicated region
              $region117: #{efficient_self_attention.1} parent=93 // pred_check
                _
              $region118: #{efficient_self_attention.1} parent=93 // pred_check_branch
                %1944 = sbr.rel target = $region120
              $region119: #{efficient_self_attention.1} parent=93 // pred_region
                _
              $region120: #{efficient_self_attention.1} parent=93 // pred_fallthru
                _
            $region94: #{efficient_self_attention.1} parent=89 // pred_fallthru
              _
            // Predicated region
            $region95: #{efficient_self_attention.1} parent=89 // pred_check
              _
            $region96: #{efficient_self_attention.1} parent=89 // pred_check_branch
              %1906 = sbr.rel target = $region98
            $region97: #{efficient_self_attention.1} parent=89 // pred_region
              %s1908 = ssub.s32 256, 1
              loop: start=0, step=1, limit=1
              $region99: #{efficient_self_attention.1} parent=97 // loop_pre_header
                _
              $region100: #{efficient_self_attention.1} parent=97 // loop_header
                %s1910 = sphi 0, %s1914
                %p1911 = scmp.ge.s32.totalorder %s1910, 1
                %s1915 = sphi %s1893, %s1893
                %s1916 = sphi %s1900, %s1900
              $region101: #{efficient_self_attention.1} parent=97 // loop_header_branch
                %1913 = sbr.rel (%p1911) target = $region105
              $region102: #{efficient_self_attention.1} parent=97 // loop_body
                %v1917 = vld [vmem:[%s1915] sm:%s1908]
                %1918 = vst [vmem:[%s1916] sm:%s1908] %v1917
                %v1919 = vld [vmem:[%s1915 + $0x8] sm:%s1908]
                %1920 = vst [vmem:[%s1916 + $0x10] sm:%s1908] %v1919
                %v1921 = vld [vmem:[%s1915 + $0x10] sm:%s1908]
                %1922 = vst [vmem:[%s1916 + $0x20] sm:%s1908] %v1921
                %v1923 = vld [vmem:[%s1915 + $0x18] sm:%s1908]
                %1924 = vst [vmem:[%s1916 + $0x30] sm:%s1908] %v1923
              $region103: #{efficient_self_attention.1} parent=97 // loop_footer
                %s1914 = sadd.s32 1, %s1910
              $region104: #{efficient_self_attention.1} parent=97 // loop_footer_branch
                %1909 = sbr.rel target = $region100
              $region105: #{efficient_self_attention.1} parent=97 // loop_exit
                _
            $region98: #{efficient_self_attention.1} parent=89 // pred_fallthru
              _
          $region90: #{efficient_self_attention.1} parent=85 // pred_fallthru
            _
          %1945 = vnop
        $region86: #{efficient_self_attention.1} parent=77 // pred_fallthru
          _
      $region78: #{efficient_self_attention.1} parent=5 // pred_fallthru
        _
      %p1946 = scmp.le.s32.totalorder 2, %s12
      // Predicated region
      $region121: #{efficient_self_attention.1} parent=5 // pred_check
        %p1947 = pneg %p1946
      $region122: #{efficient_self_attention.1} parent=5 // pred_check_branch
        %1949 = sbr.rel (%p1947) target = $region124
      $region123: #{efficient_self_attention.1} parent=5 // pred_region
        %s1950 = ssub.s32 %s12, 2
        // Predicated region
        $region125: #{efficient_self_attention.1} parent=123 // pred_check
          %p1951 = pneg %p193
        $region126: #{efficient_self_attention.1} parent=123 // pred_check_branch
          %1953 = sbr.rel (%p1951) target = $region128
        $region127: #{efficient_self_attention.1} parent=123 // pred_region
          %s1954 = sand.u32 %s178, 1
          %s1955 = sand.u32 %s178, 1
          %s1956 = smul.addr %s1955, 32
          %s1957 = scalar_lea.vmem [#allocation4], %s1956
        $region128: #{efficient_self_attention.1} parent=123 // pred_fallthru
          _
      $region124: #{efficient_self_attention.1} parent=5 // pred_fallthru
        _
    $region6: #{efficient_self_attention.1} parent=1 // loop_footer
      %s16 = sadd.s32 1, %s12
    $region7: #{efficient_self_attention.1} parent=1 // loop_footer_branch
      %11 = sbr.rel target = $region3
    $region8: #{efficient_self_attention.1} parent=1 // loop_exit
      _

</llo_original>
